<compile_context>
chip_gen: v6e
topology: v6e:2x2x1
jax: 0.10.0
libtpu: 0.0.40
codegen_flags: <defaults>
</compile_context>

<pallas_src>
import functools

import jax
import jax.numpy as jnp
from jax import lax
from jax.experimental import pallas as pl
from jax.experimental.pallas import tpu as pltpu


def bottleneck_kernel(x_ref, w1_ref, w2_ref, w3_ref, masks_ref,
                      g1_ref, b1_ref, g2_ref, b2_ref, g3_ref, b3_ref,
                      out_ref, cols_ref, *, H, W):
    # x_ref: (Cin, M), out_ref: (Cout, M), M = N*H*W (lane axis).
    _, M = x_ref.shape
    wp = w1_ref.shape[0]
    inv_m = jnp.float32(1.0 / M)
    eps = jnp.float32(1e-5)

    # Ones matrix used to push the per-channel lane reductions onto the (idle)
    # MXU instead of the XLU. Hoisted once (JAX does not CSE broadcasts).
    ones_col = jnp.ones((M, 128), jnp.float32)

    def bn_affine(y, gamma, beta):
        # y: (C, M). Per-channel batch stats via MXU dots; single-pass variance.
        sum_y = jnp.dot(y, ones_col, preferred_element_type=jnp.float32)[:, :1]
        sum_y2 = jnp.dot(y * y, ones_col, preferred_element_type=jnp.float32)[:, :1]
        mean = sum_y * inv_m                              # (C, 1)
        var = sum_y2 * inv_m - mean * mean                # biased, like PyTorch train
        scale = gamma * lax.rsqrt(var + eps)              # (C, 1)
        shift = beta - mean * scale                       # (C, 1)
        return y * scale + shift                          # 2 VALU ops per element

    def bn_relu(y, gamma, beta):
        return jnp.maximum(bn_affine(y, gamma, beta), 0.0)

    # ---- conv1 (1x1) + bn1 + relu: (wp, Cin) @ (Cin, M) ----
    h1 = jnp.dot(w1_ref[...], x_ref[...], preferred_element_type=jnp.float32)
    h1 = bn_relu(h1, g1_ref[...], b1_ref[...])            # (wp, M)

    # ---- conv2 (3x3, padding=1, stride=1) as one fused im2col matmul ----
    # Each tap = lane-axis roll (XLU) * precomputed border mask, stored at a
    # static sublane offset into the VMEM cols scratch; one K=9*wp dot follows.
    tap = 0
    for dy in (-1, 0, 1):
        for dx in (-1, 0, 1):
            row = (dy + 1) * 3 + (dx + 1)
            if dy == 0 and dx == 0:
                cols_ref[row * wp:(row + 1) * wp, :] = h1
            else:
                s = dy * W + dx
                shifted = pltpu.roll(h1, shift=(-s) % M, axis=1)
                cols_ref[row * wp:(row + 1) * wp, :] = (
                    shifted * masks_ref[tap:tap + 1, :])
                tap += 1
    h2 = jnp.dot(w2_ref[...], cols_ref[...], preferred_element_type=jnp.float32)
    h2 = bn_relu(h2, g2_ref[...], b2_ref[...])             # (wp, M)

    # ---- conv3 (1x1) + bn3: (Cout, wp) @ (wp, M) ----
    h3 = jnp.dot(w3_ref[...], h2, preferred_element_type=jnp.float32)
    h3 = bn_affine(h3, g3_ref[...], b3_ref[...])           # (Cout, M)

    # ---- residual add (identity) + relu; x re-read here, not kept live ----
    out_ref[...] = jnp.maximum(h3 + x_ref[...], 0.0)


def _prep_params(w1, w2, w3, g1, b1, g2, b2, g3, b3):
    """PyTorch OIHW / (C,) params -> kernel layouts, width padded to 8 sublanes."""
    width, Cin = w1.shape[0], w1.shape[1]
    Cout = w3.shape[0]
    wp = max(8, -(-width // 8) * 8)                      # padded width (sublane tile)

    # conv1: (width, Cin, 1, 1) -> (wp, Cin), extra rows zero
    w1_k = jnp.zeros((wp, Cin), jnp.float32).at[:width].set(w1[:, :, 0, 0])

    # conv2: (co, ci, ky, kx) -> (wp, 9*wp), column index = (ky*3+kx)*wp + ci
    w2_t = jnp.transpose(w2, (0, 2, 3, 1))               # (co, ky, kx, ci)
    w2_p = jnp.zeros((wp, 3, 3, wp), jnp.float32).at[:width, :, :, :width].set(w2_t)
    w2_k = w2_p.reshape(wp, 9 * wp)

    # conv3: (Cout, width, 1, 1) -> (Cout, wp), extra columns zero
    w3_k = jnp.zeros((Cout, wp), jnp.float32).at[:, :width].set(w3[:, :, 0, 0])

    def pad_vec(v, n, fill):
        return jnp.full((n,), fill, jnp.float32).at[:v.shape[0]].set(v).reshape(n, 1)

    g1_k, b1_k = pad_vec(g1, wp, 1.0), pad_vec(b1, wp, 0.0)
    g2_k, b2_k = pad_vec(g2, wp, 1.0), pad_vec(b2, wp, 0.0)
    g3_k, b3_k = g3.reshape(Cout, 1), b3.reshape(Cout, 1)
    return w1_k, w2_k, w3_k, g1_k, b1_k, g2_k, b2_k, g3_k, b3_k


def _make_border_masks(H, W, M):
    """(8, M) f32 validity masks for the 8 non-center 3x3 taps (order: row-major)."""
    m_idx = jnp.arange(M, dtype=jnp.int32)
    y_idx = (m_idx // W) % H
    x_idx = m_idx % W
    rows = []
    for dy in (-1, 0, 1):
        for dx in (-1, 0, 1):
            if dy == 0 and dx == 0:
                continue
            valid = ((y_idx + dy >= 0) & (y_idx + dy < H) &
                     (x_idx + dx >= 0) & (x_idx + dx < W))
            rows.append(valid.astype(jnp.float32))
    return jnp.stack(rows, axis=0)


@jax.jit
def bottleneck_forward(x_nchw, w1, w2, w3, g1, b1, g2, b2, g3, b3):
    N, Cin, H, W = x_nchw.shape
    Cout = w3.shape[0]
    M = N * H * W

    params = _prep_params(w1, w2, w3, g1, b1, g2, b2, g3, b3)
    wp = params[0].shape[0]
    masks = _make_border_masks(H, W, M)                   # (8, M) precomputed host-side

    # Lane-dense layout: channels on sublanes, flattened N*H*W on lanes.
    # TODO(synk): at real sizes accept this layout upstream / fold into BlockSpec
    # index_maps instead of paying two extra HBM passes here.
    xT = jnp.transpose(x_nchw, (1, 0, 2, 3)).reshape(Cin, M).astype(jnp.float32)

    vmem = pl.BlockSpec(memory_space=pltpu.MemorySpace.VMEM)
    flops = int(2 * M * (wp * Cin + wp * 9 * wp + Cout * wp)        # conv matmuls
                + 2 * M * 128 * (4 * wp + 2 * Cout)                 # BN sums on MXU
                + 8 * M * (2 * wp + Cout))                          # BN affine/relu/masks
    bytes_accessed = int(4 * (2 * Cin * M + Cout * M + 8 * M
                              + wp * Cin + wp * 9 * wp + Cout * wp
                              + 6 * wp + 2 * Cout))

    outT = pl.pallas_call(
        functools.partial(bottleneck_kernel, H=H, W=W),
        out_shape=jax.ShapeDtypeStruct((Cout, M), jnp.float32),
        in_specs=[vmem] * 11,
        out_specs=vmem,
        scratch_shapes=[pltpu.VMEM((9 * wp, M), jnp.float32)],      # im2col cols
        compiler_params=pltpu.CompilerParams(vmem_limit_bytes=32 * 1024 * 1024),
        cost_estimate=pl.CostEstimate(flops=flops,
                                      transcendentals=int(2 * wp + Cout),
                                      bytes_accessed=bytes_accessed),
    )(xT, *params[:3], masks, *params[3:])

    return jnp.transpose(outT.reshape(Cout, N, H, W), (1, 0, 2, 3))  # back to NCHW


def reference_forward(x, w1, w2, w3, g1, b1, g2, b2, g3, b3):
    # Pure-JAX NCHW/OIHW reference, mirroring the PyTorch module in train mode.
    def bn(y, gamma, beta, eps=1e-5):
        mean = jnp.mean(y, axis=(0, 2, 3), keepdims=True)
        var = jnp.mean((y - mean) ** 2, axis=(0, 2, 3), keepdims=True)
        return ((y - mean) * lax.rsqrt(var + eps) * gamma.reshape(1, -1, 1, 1)
                + beta.reshape(1, -1, 1, 1))

    dn = ('NCHW', 'OIHW', 'NCHW')
    h = lax.conv_general_dilated(x, w1, (1, 1), 'VALID', dimension_numbers=dn)
    h = jax.nn.relu(bn(h, g1, b1))
    h = lax.conv_general_dilated(h, w2, (1, 1), ((1, 1), (1, 1)), dimension_numbers=dn)
    h = jax.nn.relu(bn(h, g2, b2))
    h = lax.conv_general_dilated(h, w3, (1, 1), 'VALID', dimension_numbers=dn)
    h = bn(h, g3, b3)
    return jax.nn.relu(h + x)


if __name__ == "__main__":
    # Bottleneck(in_channel=16, out_channel=4, stride=1, downsample=None)
    #   width = 4, conv3 output channels = out_channel * expansion = 16 == in_channel
    N, Cin, H, W = 2, 16, 16, 16
    out_channel = 4
    expansion = 4
    width = out_channel                 # groups=1, width_per_group=64
    Cout = out_channel * expansion
    assert Cout == Cin                  # identity residual requires matching channels

    key = jax.random.PRNGKey(0)
    k_x, k1, k2, k3 = jax.random.split(key, 4)

    x = jax.random.normal(k_x, (N, Cin, H, W), dtype=jnp.float32)

    # PyTorch-native weight layouts (OIHW), bias-free convs.
    w1 = 0.1 * jax.random.normal(k1, (width, Cin, 1, 1), jnp.float32)
    w2 = 0.1 * jax.random.normal(k2, (width, width, 3, 3), jnp.float32)
    w3 = 0.1 * jax.random.normal(k3, (Cout, width, 1, 1), jnp.float32)

    # BatchNorm affine params at PyTorch init: weight=1, bias=0.
    g1 = jnp.ones((width,), jnp.float32); b1 = jnp.zeros((width,), jnp.float32)
    g2 = jnp.ones((width,), jnp.float32); b2 = jnp.zeros((width,), jnp.float32)
    g3 = jnp.ones((Cout,), jnp.float32); b3 = jnp.zeros((Cout,), jnp.float32)

    out = bottleneck_forward(x, w1, w2, w3, g1, b1, g2, b2, g3, b3)
    out = jax.block_until_ready(out)

    ref = reference_forward(x, w1, w2, w3, g1, b1, g2, b2, g3, b3)
    assert out.shape == (N, Cout, H, W)
    max_err = float(jnp.max(jnp.abs(out - ref)))
    assert jnp.allclose(out, ref, rtol=5e-4, atol=5e-4), max_err

    print("KERNEL_OK")
</pallas_src>

<mosaic_0001>
module attributes {stable_mosaic.version = 11 : i64} {
  func.func @bottleneck_kernel(%arg0: memref<16x512xf32, #tpu.memory_space<vmem>>, %arg1: memref<8x16xf32, #tpu.memory_space<vmem>>, %arg2: memref<8x72xf32, #tpu.memory_space<vmem>>, %arg3: memref<16x8xf32, #tpu.memory_space<vmem>>, %arg4: memref<8x512xf32, #tpu.memory_space<vmem>>, %arg5: memref<8x1xf32, #tpu.memory_space<vmem>>, %arg6: memref<8x1xf32, #tpu.memory_space<vmem>>, %arg7: memref<8x1xf32, #tpu.memory_space<vmem>>, %arg8: memref<8x1xf32, #tpu.memory_space<vmem>>, %arg9: memref<16x1xf32, #tpu.memory_space<vmem>>, %arg10: memref<16x1xf32, #tpu.memory_space<vmem>>, %arg11: memref<16x512xf32, #tpu.memory_space<vmem>>, %arg12: memref<72x512xf32, #tpu.memory_space<vmem>>) attributes {dimension_semantics = [], scalar_prefetch = 0 : i64, scratch_operands = 1 : i64, tpu.core_type = #tpu.core_type<tc>} {
    %cst = arith.constant 1.000000e+00 : f32
    %0 = vector.broadcast %cst : f32 to vector<512x128xf32>
    %c0 = arith.constant 0 : index
    %c0_0 = arith.constant 0 : index
    %1 = vector.load %arg1[%c0, %c0_0] : memref<8x16xf32, #tpu.memory_space<vmem>>, vector<8x16xf32>
    %c0_1 = arith.constant 0 : index
    %c0_2 = arith.constant 0 : index
    %2 = vector.load %arg0[%c0_1, %c0_2] : memref<16x512xf32, #tpu.memory_space<vmem>>, vector<16x512xf32>
    %cst_3 = arith.constant dense<0.000000e+00> : vector<8x512xf32>
    %3 = tpu.matmul %1, %2, %cst_3 {dimension_numbers = #tpu.dot_dimension_numbers<[1], [0], [0], [1], [0, 0, 1, 1], [], []>} : vector<8x16xf32>, vector<16x512xf32>, vector<8x512xf32> -> vector<8x512xf32>
    %c0_4 = arith.constant 0 : index
    %c0_5 = arith.constant 0 : index
    %4 = vector.load %arg5[%c0_4, %c0_5] : memref<8x1xf32, #tpu.memory_space<vmem>>, vector<8x1xf32>
    %c0_6 = arith.constant 0 : index
    %c0_7 = arith.constant 0 : index
    %5 = vector.load %arg6[%c0_6, %c0_7] : memref<8x1xf32, #tpu.memory_space<vmem>>, vector<8x1xf32>
    %cst_8 = arith.constant dense<0.000000e+00> : vector<8x128xf32>
    %6 = tpu.matmul %3, %0, %cst_8 {dimension_numbers = #tpu.dot_dimension_numbers<[1], [0], [0], [1], [0, 0, 1, 1], [], []>} : vector<8x512xf32>, vector<512x128xf32>, vector<8x128xf32> -> vector<8x128xf32>
    %7 = vector.extract_strided_slice %6 {offsets = [0, 0], sizes = [8, 1], strides = [1, 1]} : vector<8x128xf32> to vector<8x1xf32>
    %8 = arith.mulf %3, %3 : vector<8x512xf32>
    %cst_9 = arith.constant dense<0.000000e+00> : vector<8x128xf32>
    %9 = tpu.matmul %8, %0, %cst_9 {dimension_numbers = #tpu.dot_dimension_numbers<[1], [0], [0], [1], [0, 0, 1, 1], [], []>} : vector<8x512xf32>, vector<512x128xf32>, vector<8x128xf32> -> vector<8x128xf32>
    %10 = vector.extract_strided_slice %9 {offsets = [0, 0], sizes = [8, 1], strides = [1, 1]} : vector<8x128xf32> to vector<8x1xf32>
    %cst_10 = arith.constant 0.001953125 : f32
    %11 = vector.broadcast %cst_10 : f32 to vector<8x1xf32>
    %12 = arith.mulf %7, %11 : vector<8x1xf32>
    %cst_11 = arith.constant 0.001953125 : f32
    %13 = vector.broadcast %cst_11 : f32 to vector<8x1xf32>
    %14 = arith.mulf %10, %13 : vector<8x1xf32>
    %15 = arith.mulf %12, %12 : vector<8x1xf32>
    %16 = arith.subf %14, %15 : vector<8x1xf32>
    %cst_12 = arith.constant 9.99999974E-6 : f32
    %17 = vector.broadcast %cst_12 : f32 to vector<8x1xf32>
    %18 = arith.addf %16, %17 : vector<8x1xf32>
    %19 = math.rsqrt %18 : vector<8x1xf32>
    %20 = arith.mulf %4, %19 : vector<8x1xf32>
    %21 = arith.mulf %12, %20 : vector<8x1xf32>
    %22 = arith.subf %5, %21 : vector<8x1xf32>
    %23 = vector.broadcast %20 : vector<8x1xf32> to vector<8x512xf32>
    %24 = arith.mulf %3, %23 : vector<8x512xf32>
    %25 = vector.broadcast %22 : vector<8x1xf32> to vector<8x512xf32>
    %26 = arith.addf %24, %25 : vector<8x512xf32>
    %cst_13 = arith.constant 0.000000e+00 : f32
    %27 = vector.broadcast %cst_13 : f32 to vector<8x512xf32>
    %28 = arith.maximumf %26, %27 : vector<8x512xf32>
    %c17_i32 = arith.constant 17 : i32
    %29 = tpu.dynamic_rotate %28 by %c17_i32 dim 1 : vector<8x512xf32>, i32 -> vector<8x512xf32>
    %c0_14 = arith.constant 0 : index
    %c0_15 = arith.constant 0 : index
    %30 = vector.load %arg4[%c0_14, %c0_15] : memref<8x512xf32, #tpu.memory_space<vmem>>, vector<1x512xf32>
    %31 = vector.broadcast %30 : vector<1x512xf32> to vector<8x512xf32>
    %32 = arith.mulf %29, %31 : vector<8x512xf32>
    %c0_16 = arith.constant 0 : index
    %c0_17 = arith.constant 0 : index
    %33 = vector.load %arg12[%c0_16, %c0_17] : memref<72x512xf32, #tpu.memory_space<vmem>>, vector<8x512xf32>
    tpu.vector_store %arg12[%c0_16, %c0_17], %32 {strides = array<i32>} : memref<72x512xf32, #tpu.memory_space<vmem>>, vector<8x512xf32>,
    %c16_i32 = arith.constant 16 : i32
    %34 = tpu.dynamic_rotate %28 by %c16_i32 dim 1 : vector<8x512xf32>, i32 -> vector<8x512xf32>
    %c1 = arith.constant 1 : index
    %c0_18 = arith.constant 0 : index
    %35 = vector.load %arg4[%c1, %c0_18] : memref<8x512xf32, #tpu.memory_space<vmem>>, vector<1x512xf32>
    %36 = vector.broadcast %35 : vector<1x512xf32> to vector<8x512xf32>
    %37 = arith.mulf %34, %36 : vector<8x512xf32>
    %c8 = arith.constant 8 : index
    %c0_19 = arith.constant 0 : index
    %38 = vector.load %arg12[%c8, %c0_19] : memref<72x512xf32, #tpu.memory_space<vmem>>, vector<8x512xf32>
    tpu.vector_store %arg12[%c8, %c0_19], %37 {strides = array<i32>} : memref<72x512xf32, #tpu.memory_space<vmem>>, vector<8x512xf32>,
    %c15_i32 = arith.constant 15 : i32
    %39 = tpu.dynamic_rotate %28 by %c15_i32 dim 1 : vector<8x512xf32>, i32 -> vector<8x512xf32>
    %c2 = arith.constant 2 : index
    %c0_20 = arith.constant 0 : index
    %40 = vector.load %arg4[%c2, %c0_20] : memref<8x512xf32, #tpu.memory_space<vmem>>, vector<1x512xf32>
    %41 = vector.broadcast %40 : vector<1x512xf32> to vector<8x512xf32>
    %42 = arith.mulf %39, %41 : vector<8x512xf32>
    %c16 = arith.constant 16 : index
    %c0_21 = arith.constant 0 : index
    %43 = vector.load %arg12[%c16, %c0_21] : memref<72x512xf32, #tpu.memory_space<vmem>>, vector<8x512xf32>
    tpu.vector_store %arg12[%c16, %c0_21], %42 {strides = array<i32>} : memref<72x512xf32, #tpu.memory_space<vmem>>, vector<8x512xf32>,
    %c1_i32 = arith.constant 1 : i32
    %44 = tpu.dynamic_rotate %28 by %c1_i32 dim 1 : vector<8x512xf32>, i32 -> vector<8x512xf32>
    %c3 = arith.constant 3 : index
    %c0_22 = arith.constant 0 : index
    %45 = vector.load %arg4[%c3, %c0_22] : memref<8x512xf32, #tpu.memory_space<vmem>>, vector<1x512xf32>
    %46 = vector.broadcast %45 : vector<1x512xf32> to vector<8x512xf32>
    %47 = arith.mulf %44, %46 : vector<8x512xf32>
    %c24 = arith.constant 24 : index
    %c0_23 = arith.constant 0 : index
    %48 = vector.load %arg12[%c24, %c0_23] : memref<72x512xf32, #tpu.memory_space<vmem>>, vector<8x512xf32>
    tpu.vector_store %arg12[%c24, %c0_23], %47 {strides = array<i32>} : memref<72x512xf32, #tpu.memory_space<vmem>>, vector<8x512xf32>,
    %c32 = arith.constant 32 : index
    %c0_24 = arith.constant 0 : index
    %49 = vector.load %arg12[%c32, %c0_24] : memref<72x512xf32, #tpu.memory_space<vmem>>, vector<8x512xf32>
    tpu.vector_store %arg12[%c32, %c0_24], %28 {strides = array<i32>} : memref<72x512xf32, #tpu.memory_space<vmem>>, vector<8x512xf32>,
    %c511_i32 = arith.constant 511 : i32
    %50 = tpu.dynamic_rotate %28 by %c511_i32 dim 1 : vector<8x512xf32>, i32 -> vector<8x512xf32>
    %c4 = arith.constant 4 : index
    %c0_25 = arith.constant 0 : index
    %51 = vector.load %arg4[%c4, %c0_25] : memref<8x512xf32, #tpu.memory_space<vmem>>, vector<1x512xf32>
    %52 = vector.broadcast %51 : vector<1x512xf32> to vector<8x512xf32>
    %53 = arith.mulf %50, %52 : vector<8x512xf32>
    %c40 = arith.constant 40 : index
    %c0_26 = arith.constant 0 : index
    %54 = vector.load %arg12[%c40, %c0_26] : memref<72x512xf32, #tpu.memory_space<vmem>>, vector<8x512xf32>
    tpu.vector_store %arg12[%c40, %c0_26], %53 {strides = array<i32>} : memref<72x512xf32, #tpu.memory_space<vmem>>, vector<8x512xf32>,
    %c497_i32 = arith.constant 497 : i32
    %55 = tpu.dynamic_rotate %28 by %c497_i32 dim 1 : vector<8x512xf32>, i32 -> vector<8x512xf32>
    %c5 = arith.constant 5 : index
    %c0_27 = arith.constant 0 : index
    %56 = vector.load %arg4[%c5, %c0_27] : memref<8x512xf32, #tpu.memory_space<vmem>>, vector<1x512xf32>
    %57 = vector.broadcast %56 : vector<1x512xf32> to vector<8x512xf32>
    %58 = arith.mulf %55, %57 : vector<8x512xf32>
    %c48 = arith.constant 48 : index
    %c0_28 = arith.constant 0 : index
    %59 = vector.load %arg12[%c48, %c0_28] : memref<72x512xf32, #tpu.memory_space<vmem>>, vector<8x512xf32>
    tpu.vector_store %arg12[%c48, %c0_28], %58 {strides = array<i32>} : memref<72x512xf32, #tpu.memory_space<vmem>>, vector<8x512xf32>,
    %c496_i32 = arith.constant 496 : i32
    %60 = tpu.dynamic_rotate %28 by %c496_i32 dim 1 : vector<8x512xf32>, i32 -> vector<8x512xf32>
    %c6 = arith.constant 6 : index
    %c0_29 = arith.constant 0 : index
    %61 = vector.load %arg4[%c6, %c0_29] : memref<8x512xf32, #tpu.memory_space<vmem>>, vector<1x512xf32>
    %62 = vector.broadcast %61 : vector<1x512xf32> to vector<8x512xf32>
    %63 = arith.mulf %60, %62 : vector<8x512xf32>
    %c56 = arith.constant 56 : index
    %c0_30 = arith.constant 0 : index
    %64 = vector.load %arg12[%c56, %c0_30] : memref<72x512xf32, #tpu.memory_space<vmem>>, vector<8x512xf32>
    tpu.vector_store %arg12[%c56, %c0_30], %63 {strides = array<i32>} : memref<72x512xf32, #tpu.memory_space<vmem>>, vector<8x512xf32>,
    %c495_i32 = arith.constant 495 : i32
    %65 = tpu.dynamic_rotate %28 by %c495_i32 dim 1 : vector<8x512xf32>, i32 -> vector<8x512xf32>
    %c7 = arith.constant 7 : index
    %c0_31 = arith.constant 0 : index
    %66 = vector.load %arg4[%c7, %c0_31] : memref<8x512xf32, #tpu.memory_space<vmem>>, vector<1x512xf32>
    %67 = vector.broadcast %66 : vector<1x512xf32> to vector<8x512xf32>
    %68 = arith.mulf %65, %67 : vector<8x512xf32>
    %c64 = arith.constant 64 : index
    %c0_32 = arith.constant 0 : index
    %69 = vector.load %arg12[%c64, %c0_32] : memref<72x512xf32, #tpu.memory_space<vmem>>, vector<8x512xf32>
    tpu.vector_store %arg12[%c64, %c0_32], %68 {strides = array<i32>} : memref<72x512xf32, #tpu.memory_space<vmem>>, vector<8x512xf32>,
    %c0_33 = arith.constant 0 : index
    %c0_34 = arith.constant 0 : index
    %70 = vector.load %arg2[%c0_33, %c0_34] : memref<8x72xf32, #tpu.memory_space<vmem>>, vector<8x72xf32>
    %c0_35 = arith.constant 0 : index
    %c0_36 = arith.constant 0 : index
    %71 = vector.load %arg12[%c0_35, %c0_36] : memref<72x512xf32, #tpu.memory_space<vmem>>, vector<72x512xf32>
    %cst_37 = arith.constant dense<0.000000e+00> : vector<8x512xf32>
    %72 = tpu.matmul %70, %71, %cst_37 {dimension_numbers = #tpu.dot_dimension_numbers<[1], [0], [0], [1], [0, 0, 1, 1], [], []>} : vector<8x72xf32>, vector<72x512xf32>, vector<8x512xf32> -> vector<8x512xf32>
    %c0_38 = arith.constant 0 : index
    %c0_39 = arith.constant 0 : index
    %73 = vector.load %arg7[%c0_38, %c0_39] : memref<8x1xf32, #tpu.memory_space<vmem>>, vector<8x1xf32>
    %c0_40 = arith.constant 0 : index
    %c0_41 = arith.constant 0 : index
    %74 = vector.load %arg8[%c0_40, %c0_41] : memref<8x1xf32, #tpu.memory_space<vmem>>, vector<8x1xf32>
    %cst_42 = arith.constant dense<0.000000e+00> : vector<8x128xf32>
    %75 = tpu.matmul %72, %0, %cst_42 {dimension_numbers = #tpu.dot_dimension_numbers<[1], [0], [0], [1], [0, 0, 1, 1], [], []>} : vector<8x512xf32>, vector<512x128xf32>, vector<8x128xf32> -> vector<8x128xf32>
    %76 = vector.extract_strided_slice %75 {offsets = [0, 0], sizes = [8, 1], strides = [1, 1]} : vector<8x128xf32> to vector<8x1xf32>
    %77 = arith.mulf %72, %72 : vector<8x512xf32>
    %cst_43 = arith.constant dense<0.000000e+00> : vector<8x128xf32>
    %78 = tpu.matmul %77, %0, %cst_43 {dimension_numbers = #tpu.dot_dimension_numbers<[1], [0], [0], [1], [0, 0, 1, 1], [], []>} : vector<8x512xf32>, vector<512x128xf32>, vector<8x128xf32> -> vector<8x128xf32>
    %79 = vector.extract_strided_slice %78 {offsets = [0, 0], sizes = [8, 1], strides = [1, 1]} : vector<8x128xf32> to vector<8x1xf32>
    %cst_44 = arith.constant 0.001953125 : f32
    %80 = vector.broadcast %cst_44 : f32 to vector<8x1xf32>
    %81 = arith.mulf %76, %80 : vector<8x1xf32>
    %cst_45 = arith.constant 0.001953125 : f32
    %82 = vector.broadcast %cst_45 : f32 to vector<8x1xf32>
    %83 = arith.mulf %79, %82 : vector<8x1xf32>
    %84 = arith.mulf %81, %81 : vector<8x1xf32>
    %85 = arith.subf %83, %84 : vector<8x1xf32>
    %cst_46 = arith.constant 9.99999974E-6 : f32
    %86 = vector.broadcast %cst_46 : f32 to vector<8x1xf32>
    %87 = arith.addf %85, %86 : vector<8x1xf32>
    %88 = math.rsqrt %87 : vector<8x1xf32>
    %89 = arith.mulf %73, %88 : vector<8x1xf32>
    %90 = arith.mulf %81, %89 : vector<8x1xf32>
    %91 = arith.subf %74, %90 : vector<8x1xf32>
    %92 = vector.broadcast %89 : vector<8x1xf32> to vector<8x512xf32>
    %93 = arith.mulf %72, %92 : vector<8x512xf32>
    %94 = vector.broadcast %91 : vector<8x1xf32> to vector<8x512xf32>
    %95 = arith.addf %93, %94 : vector<8x512xf32>
    %cst_47 = arith.constant 0.000000e+00 : f32
    %96 = vector.broadcast %cst_47 : f32 to vector<8x512xf32>
    %97 = arith.maximumf %95, %96 : vector<8x512xf32>
    %c0_48 = arith.constant 0 : index
    %c0_49 = arith.constant 0 : index
    %98 = vector.load %arg3[%c0_48, %c0_49] : memref<16x8xf32, #tpu.memory_space<vmem>>, vector<16x8xf32>
    %cst_50 = arith.constant dense<0.000000e+00> : vector<16x512xf32>
    %99 = tpu.matmul %98, %97, %cst_50 {dimension_numbers = #tpu.dot_dimension_numbers<[1], [0], [0], [1], [0, 0, 1, 1], [], []>} : vector<16x8xf32>, vector<8x512xf32>, vector<16x512xf32> -> vector<16x512xf32>
    %c0_51 = arith.constant 0 : index
    %c0_52 = arith.constant 0 : index
    %100 = vector.load %arg9[%c0_51, %c0_52] : memref<16x1xf32, #tpu.memory_space<vmem>>, vector<16x1xf32>
    %c0_53 = arith.constant 0 : index
    %c0_54 = arith.constant 0 : index
    %101 = vector.load %arg10[%c0_53, %c0_54] : memref<16x1xf32, #tpu.memory_space<vmem>>, vector<16x1xf32>
    %cst_55 = arith.constant dense<0.000000e+00> : vector<16x128xf32>
    %102 = tpu.matmul %99, %0, %cst_55 {dimension_numbers = #tpu.dot_dimension_numbers<[1], [0], [0], [1], [0, 0, 1, 1], [], []>} : vector<16x512xf32>, vector<512x128xf32>, vector<16x128xf32> -> vector<16x128xf32>
    %103 = vector.extract_strided_slice %102 {offsets = [0, 0], sizes = [16, 1], strides = [1, 1]} : vector<16x128xf32> to vector<16x1xf32>
    %104 = arith.mulf %99, %99 : vector<16x512xf32>
    %cst_56 = arith.constant dense<0.000000e+00> : vector<16x128xf32>
    %105 = tpu.matmul %104, %0, %cst_56 {dimension_numbers = #tpu.dot_dimension_numbers<[1], [0], [0], [1], [0, 0, 1, 1], [], []>} : vector<16x512xf32>, vector<512x128xf32>, vector<16x128xf32> -> vector<16x128xf32>
    %106 = vector.extract_strided_slice %105 {offsets = [0, 0], sizes = [16, 1], strides = [1, 1]} : vector<16x128xf32> to vector<16x1xf32>
    %cst_57 = arith.constant 0.001953125 : f32
    %107 = vector.broadcast %cst_57 : f32 to vector<16x1xf32>
    %108 = arith.mulf %103, %107 : vector<16x1xf32>
    %cst_58 = arith.constant 0.001953125 : f32
    %109 = vector.broadcast %cst_58 : f32 to vector<16x1xf32>
    %110 = arith.mulf %106, %109 : vector<16x1xf32>
    %111 = arith.mulf %108, %108 : vector<16x1xf32>
    %112 = arith.subf %110, %111 : vector<16x1xf32>
    %cst_59 = arith.constant 9.99999974E-6 : f32
    %113 = vector.broadcast %cst_59 : f32 to vector<16x1xf32>
    %114 = arith.addf %112, %113 : vector<16x1xf32>
    %115 = math.rsqrt %114 : vector<16x1xf32>
    %116 = arith.mulf %100, %115 : vector<16x1xf32>
    %117 = arith.mulf %108, %116 : vector<16x1xf32>
    %118 = arith.subf %101, %117 : vector<16x1xf32>
    %119 = vector.broadcast %116 : vector<16x1xf32> to vector<16x512xf32>
    %120 = arith.mulf %99, %119 : vector<16x512xf32>
    %121 = vector.broadcast %118 : vector<16x1xf32> to vector<16x512xf32>
    %122 = arith.addf %120, %121 : vector<16x512xf32>
    %c0_60 = arith.constant 0 : index
    %c0_61 = arith.constant 0 : index
    %123 = vector.load %arg0[%c0_60, %c0_61] : memref<16x512xf32, #tpu.memory_space<vmem>>, vector<16x512xf32>
    %124 = arith.addf %122, %123 : vector<16x512xf32>
    %cst_62 = arith.constant 0.000000e+00 : f32
    %125 = vector.broadcast %cst_62 : f32 to vector<16x512xf32>
    %126 = arith.maximumf %124, %125 : vector<16x512xf32>
    %c0_63 = arith.constant 0 : index
    %c0_64 = arith.constant 0 : index
    %127 = vector.load %arg11[%c0_63, %c0_64] : memref<16x512xf32, #tpu.memory_space<vmem>>, vector<16x512xf32>
    tpu.vector_store %arg11[%c0_63, %c0_64], %126 {strides = array<i32>} : memref<16x512xf32, #tpu.memory_space<vmem>>, vector<16x512xf32>,
    return
  }
}

</mosaic_0001>

<llo_original>
// kernel: bottleneck_forward.1
$region0: #{bottleneck_forward.1}
  #allocation0 [shape = 'u32[]', space=smem, size = 0x4, offset = 0x4, fixed_abs, tag = 'smem constant byte address 0x4 - core index']
  #allocation1 [shape = 'u32[144,128]{1,0:T(1,128)}', space=vmem, size = 0x12000, scoped, tag = 'internal scratch']
  #allocation2 [shape = 'f32[72,512]{1,0:T(8,128)}', space=vmem, size = 0x24000, scoped, tag = 'scratch operand']
  %s0 = inlined_call_operand.vmem [shape: f32[16,512], index: 0, kind: input, shape index: {}]
  %s1 = inlined_call_operand.vmem [shape: f32[8,16], index: 1, kind: input, shape index: {}]
  %s2 = inlined_call_operand.vmem [shape: f32[8,72], index: 2, kind: input, shape index: {}]
  %s3 = inlined_call_operand.vmem [shape: f32[16,8], index: 3, kind: input, shape index: {}]
  %s4 = inlined_call_operand.vmem [shape: f32[8,512], index: 4, kind: input, shape index: {}]
  %s5 = inlined_call_operand.vmem [shape: f32[8,1], index: 5, kind: input, shape index: {}]
  %s6 = inlined_call_operand.vmem [shape: f32[8,1], index: 6, kind: input, shape index: {}]
  %s7 = inlined_call_operand.vmem [shape: f32[8,1], index: 7, kind: input, shape index: {}]
  %s8 = inlined_call_operand.vmem [shape: f32[8,1], index: 8, kind: input, shape index: {}]
  %s9 = inlined_call_operand.vmem [shape: f32[16,1], index: 9, kind: input, shape index: {}]
  %s10 = inlined_call_operand.vmem [shape: f32[16,1], index: 10, kind: input, shape index: {}]
  %s11 = inlined_call_operand.vmem [shape: f32[16,512], index: 11, kind: output, shape index: {}]
  %s12 = sld [smem:[#allocation0]]
  $region54: #{bottleneck_forward.1} parent=0
    _
  %s14 = ssub.s32 1, %s12
  %s15 = scalar_select 0, %s14, %s12
  // Predicated region
  $region2: #{bottleneck_forward.1} parent=0 // pred_check
    _
  $region3: #{bottleneck_forward.1} parent=0 // pred_check_branch
    %17 = sbr.rel (0) target = $region5
  $region4: #{bottleneck_forward.1} parent=0 // pred_region
    _
  $region5: #{bottleneck_forward.1} parent=0 // pred_fallthru
    _
  // Predicated region
  $region6: #{bottleneck_forward.1} parent=0 // pred_check
    _
  $region7: #{bottleneck_forward.1} parent=0 // pred_check_branch
    %19 = sbr.rel (0) target = $region9
  $region8: #{bottleneck_forward.1} parent=0 // pred_region
    _
  $region9: #{bottleneck_forward.1} parent=0 // pred_fallthru
    _
  // Predicated region
  $region10: #{bottleneck_forward.1} parent=0 // pred_check
    _
  $region11: #{bottleneck_forward.1} parent=0 // pred_check_branch
    %21 = sbr.rel (0) target = $region13
  $region12: #{bottleneck_forward.1} parent=0 // pred_region
    _
  $region13: #{bottleneck_forward.1} parent=0 // pred_fallthru
    _
  // Predicated region
  $region14: #{bottleneck_forward.1} parent=0 // pred_check
    _
  $region15: #{bottleneck_forward.1} parent=0 // pred_check_branch
    %23 = sbr.rel (0) target = $region17
  $region16: #{bottleneck_forward.1} parent=0 // pred_region
    _
  $region17: #{bottleneck_forward.1} parent=0 // pred_fallthru
    _
  // Predicated region
  $region18: #{bottleneck_forward.1} parent=0 // pred_check
    _
  $region19: #{bottleneck_forward.1} parent=0 // pred_check_branch
    %25 = sbr.rel (0) target = $region21
  $region20: #{bottleneck_forward.1} parent=0 // pred_region
    _
  $region21: #{bottleneck_forward.1} parent=0 // pred_fallthru
    _
  // Predicated region
  $region22: #{bottleneck_forward.1} parent=0 // pred_check
    _
  $region23: #{bottleneck_forward.1} parent=0 // pred_check_branch
    %27 = sbr.rel (0) target = $region25
  $region24: #{bottleneck_forward.1} parent=0 // pred_region
    _
  $region25: #{bottleneck_forward.1} parent=0 // pred_fallthru
    _
  // Predicated region
  $region26: #{bottleneck_forward.1} parent=0 // pred_check
    _
  $region27: #{bottleneck_forward.1} parent=0 // pred_check_branch
    %29 = sbr.rel (0) target = $region29
  $region28: #{bottleneck_forward.1} parent=0 // pred_region
    _
  $region29: #{bottleneck_forward.1} parent=0 // pred_fallthru
    _
  // Predicated region
  $region30: #{bottleneck_forward.1} parent=0 // pred_check
    _
  $region31: #{bottleneck_forward.1} parent=0 // pred_check_branch
    %31 = sbr.rel (0) target = $region33
  $region32: #{bottleneck_forward.1} parent=0 // pred_region
    _
  $region33: #{bottleneck_forward.1} parent=0 // pred_fallthru
    _
  // Predicated region
  $region34: #{bottleneck_forward.1} parent=0 // pred_check
    _
  $region35: #{bottleneck_forward.1} parent=0 // pred_check_branch
    %33 = sbr.rel (0) target = $region37
  $region36: #{bottleneck_forward.1} parent=0 // pred_region
    _
  $region37: #{bottleneck_forward.1} parent=0 // pred_fallthru
    _
  // Predicated region
  $region38: #{bottleneck_forward.1} parent=0 // pred_check
    _
  $region39: #{bottleneck_forward.1} parent=0 // pred_check_branch
    %35 = sbr.rel (0) target = $region41
  $region40: #{bottleneck_forward.1} parent=0 // pred_region
    _
  $region41: #{bottleneck_forward.1} parent=0 // pred_fallthru
    _
  // Predicated region
  $region42: #{bottleneck_forward.1} parent=0 // pred_check
    _
  $region43: #{bottleneck_forward.1} parent=0 // pred_check_branch
    %37 = sbr.rel (0) target = $region45
  $region44: #{bottleneck_forward.1} parent=0 // pred_region
    _
  $region45: #{bottleneck_forward.1} parent=0 // pred_fallthru
    _
  %v38 = vld [vmem:[%s1] sm:$0xff]
  %v39 = vld [vmem:[%s0] sm:$0xff]
  %v40 = vld [vmem:[%s0 + $0x8] sm:$0xff]
  %v41 = vld [vmem:[%s0 + $0x10] sm:$0xff]
  %v42 = vld [vmem:[%s0 + $0x18] sm:$0xff]
  %v43 = vld [vmem:[%s0 + $0x20] sm:$0xff]
  %v44 = vld [vmem:[%s0 + $0x28] sm:$0xff]
  %v45 = vld [vmem:[%s0 + $0x30] sm:$0xff]
  %v46 = vld [vmem:[%s0 + $0x38] sm:$0xff]
  %vm47 = vcmask 130048
  %v49 = vsel %vm47, %v38, 0
  %51 = vmatprep.subr.mxu0 0.0
  %52 = vmatpush1.msra.mxu0 0.0
  %53 = vmatprep.subr.mxu0 0.0
  %54 = vmatpush1.msra.mxu0 0.0
  %55 = vmatprep.subr.mxu0 0.0
  %56 = vmatpush1.msra.mxu0 0.0
  %57 = vmatprep.subr.mxu0 0.0
  %58 = vmatpush1.msra.mxu0 0.0
  %59 = vmatprep.subr.mxu0 0.0
  %60 = vmatpush1.msra.mxu0 0.0
  %61 = vmatprep.subr.mxu0 0.0
  %62 = vmatpush1.msra.mxu0 0.0
  %63 = vmatprep.subr.mxu0 0.0
  %64 = vmatpush1.msra.mxu0 0.0
  %65 = vmatprep.subr.mxu0 0.0
  %66 = vmatpush1.msra.mxu0 0.0
  %67 = vmatprep.subr.mxu0 0.0
  %68 = vmatpush1.msra.mxu0 0.0
  %69 = vmatprep.subr.mxu0 0.0
  %70 = vmatpush1.msra.mxu0 0.0
  %71 = vmatprep.subr.mxu0 0.0
  %72 = vmatpush1.msra.mxu0 0.0
  %73 = vmatprep.subr.mxu0 0.0
  %74 = vmatpush1.msra.mxu0 0.0
  %75 = vmatprep.subr.mxu0 0.0
  %76 = vmatpush1.msra.mxu0 0.0
  %77 = vmatprep.subr.mxu0 0.0
  %78 = vmatpush1.msra.mxu0 0.0
  %79 = vmatprep.subr.mxu0 %v44
  %80 = vmatpush1.msra.mxu0 %v43
  %81 = vmatprep.subr.mxu0 %v40
  %82 = vmatpush1.msra.mxu0 %v39
  %83 = vmatprep.subr.mxu0 0.0
  %84 = vmatpush2.msra.mxu0 0.0
  %85 = vmatprep.subr.mxu0 0.0
  %86 = vmatpush2.msra.mxu0 0.0
  %87 = vmatprep.subr.mxu0 0.0
  %88 = vmatpush2.msra.mxu0 0.0
  %89 = vmatprep.subr.mxu0 0.0
  %90 = vmatpush2.msra.mxu0 0.0
  %91 = vmatprep.subr.mxu0 0.0
  %92 = vmatpush2.msra.mxu0 0.0
  %93 = vmatprep.subr.mxu0 0.0
  %94 = vmatpush2.msra.mxu0 0.0
  %95 = vmatprep.subr.mxu0 0.0
  %96 = vmatpush2.msra.mxu0 0.0
  %97 = vmatprep.subr.mxu0 0.0
  %98 = vmatpush2.msra.mxu0 0.0
  %99 = vmatprep.subr.mxu0 0.0
  %100 = vmatpush2.msra.mxu0 0.0
  %101 = vmatprep.subr.mxu0 0.0
  %102 = vmatpush2.msra.mxu0 0.0
  %103 = vmatprep.subr.mxu0 0.0
  %104 = vmatpush2.msra.mxu0 0.0
  %105 = vmatprep.subr.mxu0 0.0
  %106 = vmatpush2.msra.mxu0 0.0
  %107 = vmatprep.subr.mxu0 0.0
  %108 = vmatpush2.msra.mxu0 0.0
  %109 = vmatprep.subr.mxu0 0.0
  %110 = vmatpush2.msra.mxu0 0.0
  %111 = vmatprep.subr.mxu0 0.0
  %112 = vmatpush2.msra.mxu0 0.0
  %113 = vmatprep.subr.mxu0 0.0
  %114 = vmatpush2.msra.mxu0 0.0
  %115 = vmatprep.mubr.f32.mxu0 0.0
  %116 = vmatmul.mubr.f32.gmra.mxu0 %v49
  %v117 = vpop.f32.mrf.mxu0
  %v118 = vadd.f32 0.0, %v117
  %v119 = vpop.f32.mrf.mxu0
  %v120 = vadd.f32 0.0, %v119
  %121 = vdwg.mxu0
  %122 = vmatprep.subr.mxu0 0.0
  %123 = vmatpush1.msra.mxu0 0.0
  %124 = vmatprep.subr.mxu0 0.0
  %125 = vmatpush1.msra.mxu0 0.0
  %126 = vmatprep.subr.mxu0 0.0
  %127 = vmatpush1.msra.mxu0 0.0
  %128 = vmatprep.subr.mxu0 0.0
  %129 = vmatpush1.msra.mxu0 0.0
  %130 = vmatprep.subr.mxu0 0.0
  %131 = vmatpush1.msra.mxu0 0.0
  %132 = vmatprep.subr.mxu0 0.0
  %133 = vmatpush1.msra.mxu0 0.0
  %134 = vmatprep.subr.mxu0 0.0
  %135 = vmatpush1.msra.mxu0 0.0
  %136 = vmatprep.subr.mxu0 0.0
  %137 = vmatpush1.msra.mxu0 0.0
  %138 = vmatprep.subr.mxu0 0.0
  %139 = vmatpush1.msra.mxu0 0.0
  %140 = vmatprep.subr.mxu0 0.0
  %141 = vmatpush1.msra.mxu0 0.0
  %142 = vmatprep.subr.mxu0 0.0
  %143 = vmatpush1.msra.mxu0 0.0
  %144 = vmatprep.subr.mxu0 0.0
  %145 = vmatpush1.msra.mxu0 0.0
  %146 = vmatprep.subr.mxu0 0.0
  %147 = vmatpush1.msra.mxu0 0.0
  %148 = vmatprep.subr.mxu0 0.0
  %149 = vmatpush1.msra.mxu0 0.0
  %150 = vmatprep.subr.mxu0 %v46
  %151 = vmatpush1.msra.mxu0 %v45
  %152 = vmatprep.subr.mxu0 %v42
  %153 = vmatpush1.msra.mxu0 %v41
  %154 = vmatprep.subr.mxu0 0.0
  %155 = vmatpush2.msra.mxu0 0.0
  %156 = vmatprep.subr.mxu0 0.0
  %157 = vmatpush2.msra.mxu0 0.0
  %158 = vmatprep.subr.mxu0 0.0
  %159 = vmatpush2.msra.mxu0 0.0
  %160 = vmatprep.subr.mxu0 0.0
  %161 = vmatpush2.msra.mxu0 0.0
  %162 = vmatprep.subr.mxu0 0.0
  %163 = vmatpush2.msra.mxu0 0.0
  %164 = vmatprep.subr.mxu0 0.0
  %165 = vmatpush2.msra.mxu0 0.0
  %166 = vmatprep.subr.mxu0 0.0
  %167 = vmatpush2.msra.mxu0 0.0
  %168 = vmatprep.subr.mxu0 0.0
  %169 = vmatpush2.msra.mxu0 0.0
  %170 = vmatprep.subr.mxu0 0.0
  %171 = vmatpush2.msra.mxu0 0.0
  %172 = vmatprep.subr.mxu0 0.0
  %173 = vmatpush2.msra.mxu0 0.0
  %174 = vmatprep.subr.mxu0 0.0
  %175 = vmatpush2.msra.mxu0 0.0
  %176 = vmatprep.subr.mxu0 0.0
  %177 = vmatpush2.msra.mxu0 0.0
  %178 = vmatprep.subr.mxu0 0.0
  %179 = vmatpush2.msra.mxu0 0.0
  %180 = vmatprep.subr.mxu0 0.0
  %181 = vmatpush2.msra.mxu0 0.0
  %182 = vmatprep.subr.mxu0 0.0
  %183 = vmatpush2.msra.mxu0 0.0
  %184 = vmatprep.subr.mxu0 0.0
  %185 = vmatpush2.msra.mxu0 0.0
  %186 = vmatprep.mubr.f32.mxu0 0.0
  %187 = vmatmul.mubr.f32.gmra.mxu0 %v49
  %v188 = vpop.f32.mrf.mxu0
  %v189 = vadd.f32 0.0, %v188
  %v190 = vpop.f32.mrf.mxu0
  %v191 = vadd.f32 0.0, %v190
  %192 = vdwg.mxu0
  %v193 = vld [vmem:[%s5] sm:$0xff]
  %v194 = vld [vmem:[%s6] sm:$0xff]
  %195 = vmatprep.subr.mxu0 0.0
  %196 = vmatpush1.msra.mxu0 1.0
  %197 = vmatprep.subr.mxu0 0.0
  %198 = vmatpush1.msra.mxu0 1.0
  %199 = vmatprep.subr.mxu0 0.0
  %200 = vmatpush1.msra.mxu0 1.0
  %201 = vmatprep.subr.mxu0 0.0
  %202 = vmatpush1.msra.mxu0 1.0
  %203 = vmatprep.subr.mxu0 0.0
  %204 = vmatpush1.msra.mxu0 1.0
  %205 = vmatprep.subr.mxu0 0.0
  %206 = vmatpush1.msra.mxu0 1.0
  %207 = vmatprep.subr.mxu0 0.0
  %208 = vmatpush1.msra.mxu0 1.0
  %209 = vmatprep.subr.mxu0 0.0
  %210 = vmatpush1.msra.mxu0 1.0
  %211 = vmatprep.subr.mxu0 0.0
  %212 = vmatpush1.msra.mxu0 1.0
  %213 = vmatprep.subr.mxu0 0.0
  %214 = vmatpush1.msra.mxu0 1.0
  %215 = vmatprep.subr.mxu0 0.0
  %216 = vmatpush1.msra.mxu0 1.0
  %217 = vmatprep.subr.mxu0 0.0
  %218 = vmatpush1.msra.mxu0 1.0
  %219 = vmatprep.subr.mxu0 0.0
  %220 = vmatpush1.msra.mxu0 1.0
  %221 = vmatprep.subr.mxu0 0.0
  %222 = vmatpush1.msra.mxu0 1.0
  %223 = vmatprep.subr.mxu0 0.0
  %224 = vmatpush1.msra.mxu0 1.0
  %225 = vmatprep.subr.mxu0 0.0
  %226 = vmatpush1.msra.mxu0 1.0
  %227 = vmatprep.subr.mxu0 0.0
  %228 = vmatpush2.msra.mxu0 1.0
  %229 = vmatprep.subr.mxu0 0.0
  %230 = vmatpush2.msra.mxu0 1.0
  %231 = vmatprep.subr.mxu0 0.0
  %232 = vmatpush2.msra.mxu0 1.0
  %233 = vmatprep.subr.mxu0 0.0
  %234 = vmatpush2.msra.mxu0 1.0
  %235 = vmatprep.subr.mxu0 0.0
  %236 = vmatpush2.msra.mxu0 1.0
  %237 = vmatprep.subr.mxu0 0.0
  %238 = vmatpush2.msra.mxu0 1.0
  %239 = vmatprep.subr.mxu0 0.0
  %240 = vmatpush2.msra.mxu0 1.0
  %241 = vmatprep.subr.mxu0 0.0
  %242 = vmatpush2.msra.mxu0 1.0
  %243 = vmatprep.subr.mxu0 0.0
  %244 = vmatpush2.msra.mxu0 1.0
  %245 = vmatprep.subr.mxu0 0.0
  %246 = vmatpush2.msra.mxu0 1.0
  %247 = vmatprep.subr.mxu0 0.0
  %248 = vmatpush2.msra.mxu0 1.0
  %249 = vmatprep.subr.mxu0 0.0
  %250 = vmatpush2.msra.mxu0 1.0
  %251 = vmatprep.subr.mxu0 0.0
  %252 = vmatpush2.msra.mxu0 1.0
  %253 = vmatprep.subr.mxu0 0.0
  %254 = vmatpush2.msra.mxu0 1.0
  %255 = vmatprep.subr.mxu0 0.0
  %256 = vmatpush2.msra.mxu0 1.0
  %257 = vmatprep.subr.mxu0 0.0
  %258 = vmatpush2.msra.mxu0 1.0
  %259 = vmatprep.mubr.f32.mxu0 %v120
  %260 = vmatmul.mubr.f32.gmra.mxu0 %v118
  %v261 = vpop.f32.mrf.mxu0
  %v262 = vadd.f32 0.0, %v261
  %v263 = vpop.f32.mrf.mxu0
  %264 = vdwg.mxu0
  %265 = vmatprep.subr.mxu0 0.0
  %266 = vmatpush1.msra.mxu0 1.0
  %267 = vmatprep.subr.mxu0 0.0
  %268 = vmatpush1.msra.mxu0 1.0
  %269 = vmatprep.subr.mxu0 0.0
  %270 = vmatpush1.msra.mxu0 1.0
  %271 = vmatprep.subr.mxu0 0.0
  %272 = vmatpush1.msra.mxu0 1.0
  %273 = vmatprep.subr.mxu0 0.0
  %274 = vmatpush1.msra.mxu0 1.0
  %275 = vmatprep.subr.mxu0 0.0
  %276 = vmatpush1.msra.mxu0 1.0
  %277 = vmatprep.subr.mxu0 0.0
  %278 = vmatpush1.msra.mxu0 1.0
  %279 = vmatprep.subr.mxu0 0.0
  %280 = vmatpush1.msra.mxu0 1.0
  %281 = vmatprep.subr.mxu0 0.0
  %282 = vmatpush1.msra.mxu0 1.0
  %283 = vmatprep.subr.mxu0 0.0
  %284 = vmatpush1.msra.mxu0 1.0
  %285 = vmatprep.subr.mxu0 0.0
  %286 = vmatpush1.msra.mxu0 1.0
  %287 = vmatprep.subr.mxu0 0.0
  %288 = vmatpush1.msra.mxu0 1.0
  %289 = vmatprep.subr.mxu0 0.0
  %290 = vmatpush1.msra.mxu0 1.0
  %291 = vmatprep.subr.mxu0 0.0
  %292 = vmatpush1.msra.mxu0 1.0
  %293 = vmatprep.subr.mxu0 0.0
  %294 = vmatpush1.msra.mxu0 1.0
  %295 = vmatprep.subr.mxu0 0.0
  %296 = vmatpush1.msra.mxu0 1.0
  %297 = vmatprep.subr.mxu0 0.0
  %298 = vmatpush2.msra.mxu0 1.0
  %299 = vmatprep.subr.mxu0 0.0
  %300 = vmatpush2.msra.mxu0 1.0
  %301 = vmatprep.subr.mxu0 0.0
  %302 = vmatpush2.msra.mxu0 1.0
  %303 = vmatprep.subr.mxu0 0.0
  %304 = vmatpush2.msra.mxu0 1.0
  %305 = vmatprep.subr.mxu0 0.0
  %306 = vmatpush2.msra.mxu0 1.0
  %307 = vmatprep.subr.mxu0 0.0
  %308 = vmatpush2.msra.mxu0 1.0
  %309 = vmatprep.subr.mxu0 0.0
  %310 = vmatpush2.msra.mxu0 1.0
  %311 = vmatprep.subr.mxu0 0.0
  %312 = vmatpush2.msra.mxu0 1.0
  %313 = vmatprep.subr.mxu0 0.0
  %314 = vmatpush2.msra.mxu0 1.0
  %315 = vmatprep.subr.mxu0 0.0
  %316 = vmatpush2.msra.mxu0 1.0
  %317 = vmatprep.subr.mxu0 0.0
  %318 = vmatpush2.msra.mxu0 1.0
  %319 = vmatprep.subr.mxu0 0.0
  %320 = vmatpush2.msra.mxu0 1.0
  %321 = vmatprep.subr.mxu0 0.0
  %322 = vmatpush2.msra.mxu0 1.0
  %323 = vmatprep.subr.mxu0 0.0
  %324 = vmatpush2.msra.mxu0 1.0
  %325 = vmatprep.subr.mxu0 0.0
  %326 = vmatpush2.msra.mxu0 1.0
  %327 = vmatprep.subr.mxu0 0.0
  %328 = vmatpush2.msra.mxu0 1.0
  %329 = vmatprep.mubr.f32.mxu0 %v191
  %330 = vmatmul.mubr.f32.gmra.mxu0 %v189
  %v331 = vpop.f32.mrf.mxu0
  %v332 = vadd.f32 %v262, %v331
  %v333 = vpop.f32.mrf.mxu0
  %334 = vdwg.mxu0
  %v335 = vmul.f32 %v118, %v118
  %v336 = vmul.f32 %v120, %v120
  %v337 = vmul.f32 %v189, %v189
  %v338 = vmul.f32 %v191, %v191
  %339 = vmatprep.subr.mxu0 0.0
  %340 = vmatpush1.msra.mxu0 1.0
  %341 = vmatprep.subr.mxu0 0.0
  %342 = vmatpush1.msra.mxu0 1.0
  %343 = vmatprep.subr.mxu0 0.0
  %344 = vmatpush1.msra.mxu0 1.0
  %345 = vmatprep.subr.mxu0 0.0
  %346 = vmatpush1.msra.mxu0 1.0
  %347 = vmatprep.subr.mxu0 0.0
  %348 = vmatpush1.msra.mxu0 1.0
  %349 = vmatprep.subr.mxu0 0.0
  %350 = vmatpush1.msra.mxu0 1.0
  %351 = vmatprep.subr.mxu0 0.0
  %352 = vmatpush1.msra.mxu0 1.0
  %353 = vmatprep.subr.mxu0 0.0
  %354 = vmatpush1.msra.mxu0 1.0
  %355 = vmatprep.subr.mxu0 0.0
  %356 = vmatpush1.msra.mxu0 1.0
  %357 = vmatprep.subr.mxu0 0.0
  %358 = vmatpush1.msra.mxu0 1.0
  %359 = vmatprep.subr.mxu0 0.0
  %360 = vmatpush1.msra.mxu0 1.0
  %361 = vmatprep.subr.mxu0 0.0
  %362 = vmatpush1.msra.mxu0 1.0
  %363 = vmatprep.subr.mxu0 0.0
  %364 = vmatpush1.msra.mxu0 1.0
  %365 = vmatprep.subr.mxu0 0.0
  %366 = vmatpush1.msra.mxu0 1.0
  %367 = vmatprep.subr.mxu0 0.0
  %368 = vmatpush1.msra.mxu0 1.0
  %369 = vmatprep.subr.mxu0 0.0
  %370 = vmatpush1.msra.mxu0 1.0
  %371 = vmatprep.subr.mxu0 0.0
  %372 = vmatpush2.msra.mxu0 1.0
  %373 = vmatprep.subr.mxu0 0.0
  %374 = vmatpush2.msra.mxu0 1.0
  %375 = vmatprep.subr.mxu0 0.0
  %376 = vmatpush2.msra.mxu0 1.0
  %377 = vmatprep.subr.mxu0 0.0
  %378 = vmatpush2.msra.mxu0 1.0
  %379 = vmatprep.subr.mxu0 0.0
  %380 = vmatpush2.msra.mxu0 1.0
  %381 = vmatprep.subr.mxu0 0.0
  %382 = vmatpush2.msra.mxu0 1.0
  %383 = vmatprep.subr.mxu0 0.0
  %384 = vmatpush2.msra.mxu0 1.0
  %385 = vmatprep.subr.mxu0 0.0
  %386 = vmatpush2.msra.mxu0 1.0
  %387 = vmatprep.subr.mxu0 0.0
  %388 = vmatpush2.msra.mxu0 1.0
  %389 = vmatprep.subr.mxu0 0.0
  %390 = vmatpush2.msra.mxu0 1.0
  %391 = vmatprep.subr.mxu0 0.0
  %392 = vmatpush2.msra.mxu0 1.0
  %393 = vmatprep.subr.mxu0 0.0
  %394 = vmatpush2.msra.mxu0 1.0
  %395 = vmatprep.subr.mxu0 0.0
  %396 = vmatpush2.msra.mxu0 1.0
  %397 = vmatprep.subr.mxu0 0.0
  %398 = vmatpush2.msra.mxu0 1.0
  %399 = vmatprep.subr.mxu0 0.0
  %400 = vmatpush2.msra.mxu0 1.0
  %401 = vmatprep.subr.mxu0 0.0
  %402 = vmatpush2.msra.mxu0 1.0
  %403 = vmatprep.mubr.f32.mxu0 %v336
  %404 = vmatmul.mubr.f32.gmra.mxu0 %v335
  %v405 = vpop.f32.mrf.mxu0
  %v406 = vadd.f32 0.0, %v405
  %v407 = vpop.f32.mrf.mxu0
  %408 = vdwg.mxu0
  %409 = vmatprep.subr.mxu0 0.0
  %410 = vmatpush1.msra.mxu0 1.0
  %411 = vmatprep.subr.mxu0 0.0
  %412 = vmatpush1.msra.mxu0 1.0
  %413 = vmatprep.subr.mxu0 0.0
  %414 = vmatpush1.msra.mxu0 1.0
  %415 = vmatprep.subr.mxu0 0.0
  %416 = vmatpush1.msra.mxu0 1.0
  %417 = vmatprep.subr.mxu0 0.0
  %418 = vmatpush1.msra.mxu0 1.0
  %419 = vmatprep.subr.mxu0 0.0
  %420 = vmatpush1.msra.mxu0 1.0
  %421 = vmatprep.subr.mxu0 0.0
  %422 = vmatpush1.msra.mxu0 1.0
  %423 = vmatprep.subr.mxu0 0.0
  %424 = vmatpush1.msra.mxu0 1.0
  %425 = vmatprep.subr.mxu0 0.0
  %426 = vmatpush1.msra.mxu0 1.0
  %427 = vmatprep.subr.mxu0 0.0
  %428 = vmatpush1.msra.mxu0 1.0
  %429 = vmatprep.subr.mxu0 0.0
  %430 = vmatpush1.msra.mxu0 1.0
  %431 = vmatprep.subr.mxu0 0.0
  %432 = vmatpush1.msra.mxu0 1.0
  %433 = vmatprep.subr.mxu0 0.0
  %434 = vmatpush1.msra.mxu0 1.0
  %435 = vmatprep.subr.mxu0 0.0
  %436 = vmatpush1.msra.mxu0 1.0
  %437 = vmatprep.subr.mxu0 0.0
  %438 = vmatpush1.msra.mxu0 1.0
  %439 = vmatprep.subr.mxu0 0.0
  %440 = vmatpush1.msra.mxu0 1.0
  %441 = vmatprep.subr.mxu0 0.0
  %442 = vmatpush2.msra.mxu0 1.0
  %443 = vmatprep.subr.mxu0 0.0
  %444 = vmatpush2.msra.mxu0 1.0
  %445 = vmatprep.subr.mxu0 0.0
  %446 = vmatpush2.msra.mxu0 1.0
  %447 = vmatprep.subr.mxu0 0.0
  %448 = vmatpush2.msra.mxu0 1.0
  %449 = vmatprep.subr.mxu0 0.0
  %450 = vmatpush2.msra.mxu0 1.0
  %451 = vmatprep.subr.mxu0 0.0
  %452 = vmatpush2.msra.mxu0 1.0
  %453 = vmatprep.subr.mxu0 0.0
  %454 = vmatpush2.msra.mxu0 1.0
  %455 = vmatprep.subr.mxu0 0.0
  %456 = vmatpush2.msra.mxu0 1.0
  %457 = vmatprep.subr.mxu0 0.0
  %458 = vmatpush2.msra.mxu0 1.0
  %459 = vmatprep.subr.mxu0 0.0
  %460 = vmatpush2.msra.mxu0 1.0
  %461 = vmatprep.subr.mxu0 0.0
  %462 = vmatpush2.msra.mxu0 1.0
  %463 = vmatprep.subr.mxu0 0.0
  %464 = vmatpush2.msra.mxu0 1.0
  %465 = vmatprep.subr.mxu0 0.0
  %466 = vmatpush2.msra.mxu0 1.0
  %467 = vmatprep.subr.mxu0 0.0
  %468 = vmatpush2.msra.mxu0 1.0
  %469 = vmatprep.subr.mxu0 0.0
  %470 = vmatpush2.msra.mxu0 1.0
  %471 = vmatprep.subr.mxu0 0.0
  %472 = vmatpush2.msra.mxu0 1.0
  %473 = vmatprep.mubr.f32.mxu0 %v338
  %474 = vmatmul.mubr.f32.gmra.mxu0 %v337
  %v475 = vpop.f32.mrf.mxu0
  %v476 = vadd.f32 %v406, %v475
  %v477 = vpop.f32.mrf.mxu0
  %478 = vdwg.mxu0
  %v479 = vmul.f32 %v332, 0.001953125
  %v480 = vmul.f32 %v476, 0.001953125
  %v481 = vmul.f32 %v479, %v479
  %v482 = vsub.f32 %v480, %v481
  %v483 = vadd.f32 %v482, 1e-05
  %v484 = vrsqrt.pop %v483
  %v485 = vmul.f32 %v193, %v484
  %v486 = vmul.f32 %v479, %v485
  %v487 = vsub.f32 %v194, %v486
  %489 = vset.pattern.permute.xlu0 0
  %490 = vperm.xlu0 %489, %v485
  %v491 = vpop.permute.xlu0 %490
  %v493 = vmul.f32 %v118, %v491
  %v494 = vmul.f32 %v120, %v491
  %v495 = vmul.f32 %v189, %v491
  %v496 = vmul.f32 %v191, %v491
  %498 = vset.pattern.permute.xlu0 0
  %499 = vperm.xlu0 %498, %v487
  %v500 = vpop.permute.xlu0 %499
  %v502 = vadd.f32 %v493, %v500
  %v503 = vadd.f32 %v494, %v500
  %v504 = vadd.f32 %v495, %v500
  %v505 = vadd.f32 %v496, %v500
  %v506 = vmax.f32 %v502, 0.0
  %v507 = vmax.f32 %v503, 0.0
  %v508 = vmax.f32 %v504, 0.0
  %v509 = vmax.f32 %v505, 0.0
  %510 = vrot.lane.b32.xlu0 %v506, 17
  %v511 = vpop.permute.xlu0 %510
  %512 = vrot.lane.b32.xlu0 %v507, 17
  %v513 = vpop.permute.xlu0 %512
  %514 = vrot.lane.b32.xlu0 %v508, 17
  %v515 = vpop.permute.xlu0 %514
  %516 = vrot.lane.b32.xlu0 %v509, 17
  %v517 = vpop.permute.xlu0 %516
  %v518 = vlaneseq
  %v519 = vand.u32 %v518, 127
  %vm520 = vcmp.lt.s32.totalorder %v519, 17
  %v521 = vsel %vm520, %v515, %v517
  %v522 = vsel %vm520, %v513, %v515
  %v523 = vsel %vm520, %v511, %v513
  %v524 = vsel %vm520, %v517, %v511
  %v525 = vld [vmem:[%s4] ss:$8 sm:$0xf]
  %v527 = vlaneseq
  %v528 = vshrl.u32 %v527, 7
  %v529 = vsub.s32 0, %v528
  %v530 = vrot.slane %v525, %v529
  %v531 = vlaneseq
  %v532 = vshrl.u32 %v531, 7
  %v533 = vsub.s32 1, %v532
  %v534 = vrot.slane %v525, %v533
  %v535 = vlaneseq
  %v536 = vshrl.u32 %v535, 7
  %v537 = vsub.s32 2, %v536
  %v538 = vrot.slane %v525, %v537
  %v539 = vlaneseq
  %v540 = vshrl.u32 %v539, 7
  %v541 = vsub.s32 3, %v540
  %v542 = vrot.slane %v525, %v541
  %v547 = vmul.f32 %v524, %v530
  %v548 = vmul.f32 %v523, %v534
  %v549 = vmul.f32 %v522, %v538
  %v550 = vmul.f32 %v521, %v542
  %551 = vst [vmem:[#allocation2] sm:$0xff] %v547
  %552 = vst [vmem:[#allocation2 + $0x8] sm:$0xff] %v548
  %553 = vst [vmem:[#allocation2 + $0x10] sm:$0xff] %v549
  %554 = vst [vmem:[#allocation2 + $0x18] sm:$0xff] %v550
  %555 = vrot.lane.b32.xlu0 %v506, 16
  %v556 = vpop.permute.xlu0 %555
  %557 = vrot.lane.b32.xlu0 %v507, 16
  %v558 = vpop.permute.xlu0 %557
  %559 = vrot.lane.b32.xlu0 %v508, 16
  %v560 = vpop.permute.xlu0 %559
  %561 = vrot.lane.b32.xlu0 %v509, 16
  %v562 = vpop.permute.xlu0 %561
  %vm563 = vcmp.lt.s32.totalorder %v519, 16
  %v564 = vsel %vm563, %v560, %v562
  %v565 = vsel %vm563, %v558, %v560
  %v566 = vsel %vm563, %v556, %v558
  %v567 = vsel %vm563, %v562, %v556
  %s568 = scalar_lea.vmem %s4, 1
  %v569 = vld [vmem:[%s568] ss:$8 sm:$0xf]
  %v571 = vlaneseq
  %v572 = vshrl.u32 %v571, 7
  %v573 = vsub.s32 0, %v572
  %v574 = vrot.slane %v569, %v573
  %v575 = vlaneseq
  %v576 = vshrl.u32 %v575, 7
  %v577 = vsub.s32 1, %v576
  %v578 = vrot.slane %v569, %v577
  %v579 = vlaneseq
  %v580 = vshrl.u32 %v579, 7
  %v581 = vsub.s32 2, %v580
  %v582 = vrot.slane %v569, %v581
  %v583 = vlaneseq
  %v584 = vshrl.u32 %v583, 7
  %v585 = vsub.s32 3, %v584
  %v586 = vrot.slane %v569, %v585
  %v591 = vmul.f32 %v567, %v574
  %v592 = vmul.f32 %v566, %v578
  %v593 = vmul.f32 %v565, %v582
  %v594 = vmul.f32 %v564, %v586
  %595 = vst [vmem:[#allocation2 + $0x20] sm:$0xff] %v591
  %596 = vst [vmem:[#allocation2 + $0x28] sm:$0xff] %v592
  %597 = vst [vmem:[#allocation2 + $0x30] sm:$0xff] %v593
  %598 = vst [vmem:[#allocation2 + $0x38] sm:$0xff] %v594
  %599 = vrot.lane.b32.xlu0 %v506, 15
  %v600 = vpop.permute.xlu0 %599
  %601 = vrot.lane.b32.xlu0 %v507, 15
  %v602 = vpop.permute.xlu0 %601
  %603 = vrot.lane.b32.xlu0 %v508, 15
  %v604 = vpop.permute.xlu0 %603
  %605 = vrot.lane.b32.xlu0 %v509, 15
  %v606 = vpop.permute.xlu0 %605
  %vm607 = vcmp.lt.s32.totalorder %v519, 15
  %v608 = vsel %vm607, %v604, %v606
  %v609 = vsel %vm607, %v602, %v604
  %v610 = vsel %vm607, %v600, %v602
  %v611 = vsel %vm607, %v606, %v600
  %s612 = scalar_lea.vmem %s4, 2
  %v613 = vld [vmem:[%s612] ss:$8 sm:$0xf]
  %v615 = vlaneseq
  %v616 = vshrl.u32 %v615, 7
  %v617 = vsub.s32 0, %v616
  %v618 = vrot.slane %v613, %v617
  %v619 = vlaneseq
  %v620 = vshrl.u32 %v619, 7
  %v621 = vsub.s32 1, %v620
  %v622 = vrot.slane %v613, %v621
  %v623 = vlaneseq
  %v624 = vshrl.u32 %v623, 7
  %v625 = vsub.s32 2, %v624
  %v626 = vrot.slane %v613, %v625
  %v627 = vlaneseq
  %v628 = vshrl.u32 %v627, 7
  %v629 = vsub.s32 3, %v628
  %v630 = vrot.slane %v613, %v629
  %v635 = vmul.f32 %v611, %v618
  %v636 = vmul.f32 %v610, %v622
  %v637 = vmul.f32 %v609, %v626
  %v638 = vmul.f32 %v608, %v630
  %639 = vst [vmem:[#allocation2 + $0x40] sm:$0xff] %v635
  %640 = vst [vmem:[#allocation2 + $0x48] sm:$0xff] %v636
  %641 = vst [vmem:[#allocation2 + $0x50] sm:$0xff] %v637
  %642 = vst [vmem:[#allocation2 + $0x58] sm:$0xff] %v638
  %643 = vrot.lane.b32.xlu0 %v506, 1
  %v644 = vpop.permute.xlu0 %643
  %645 = vrot.lane.b32.xlu0 %v507, 1
  %v646 = vpop.permute.xlu0 %645
  %647 = vrot.lane.b32.xlu0 %v508, 1
  %v648 = vpop.permute.xlu0 %647
  %649 = vrot.lane.b32.xlu0 %v509, 1
  %v650 = vpop.permute.xlu0 %649
  %vm651 = vcmp.lt.s32.totalorder %v519, 1
  %v652 = vsel %vm651, %v648, %v650
  %v653 = vsel %vm651, %v646, %v648
  %v654 = vsel %vm651, %v644, %v646
  %v655 = vsel %vm651, %v650, %v644
  %s656 = scalar_lea.vmem %s4, 3
  %v657 = vld [vmem:[%s656] ss:$8 sm:$0xf]
  %v659 = vlaneseq
  %v660 = vshrl.u32 %v659, 7
  %v661 = vsub.s32 0, %v660
  %v662 = vrot.slane %v657, %v661
  %v663 = vlaneseq
  %v664 = vshrl.u32 %v663, 7
  %v665 = vsub.s32 1, %v664
  %v666 = vrot.slane %v657, %v665
  %v667 = vlaneseq
  %v668 = vshrl.u32 %v667, 7
  %v669 = vsub.s32 2, %v668
  %v670 = vrot.slane %v657, %v669
  %v671 = vlaneseq
  %v672 = vshrl.u32 %v671, 7
  %v673 = vsub.s32 3, %v672
  %v674 = vrot.slane %v657, %v673
  %v679 = vmul.f32 %v655, %v662
  %v680 = vmul.f32 %v654, %v666
  %v681 = vmul.f32 %v653, %v670
  %v682 = vmul.f32 %v652, %v674
  %683 = vst [vmem:[#allocation2 + $0x60] sm:$0xff] %v679
  %684 = vst [vmem:[#allocation2 + $0x68] sm:$0xff] %v680
  %685 = vst [vmem:[#allocation2 + $0x70] sm:$0xff] %v681
  %686 = vst [vmem:[#allocation2 + $0x78] sm:$0xff] %v682
  %687 = vst [vmem:[#allocation2 + $0x80] sm:$0xff] %v506
  %688 = vst [vmem:[#allocation2 + $0x88] sm:$0xff] %v507
  %689 = vst [vmem:[#allocation2 + $0x90] sm:$0xff] %v508
  %690 = vst [vmem:[#allocation2 + $0x98] sm:$0xff] %v509
  %691 = vrot.lane.b32.xlu0 %v506, 127
  %v692 = vpop.permute.xlu0 %691
  %693 = vrot.lane.b32.xlu0 %v507, 127
  %v694 = vpop.permute.xlu0 %693
  %695 = vrot.lane.b32.xlu0 %v508, 127
  %v696 = vpop.permute.xlu0 %695
  %697 = vrot.lane.b32.xlu0 %v509, 127
  %v698 = vpop.permute.xlu0 %697
  %vm699 = vcmp.lt.s32.totalorder %v519, 127
  %v700 = vsel %vm699, %v696, %v698
  %v701 = vsel %vm699, %v694, %v696
  %v702 = vsel %vm699, %v692, %v694
  %v703 = vsel %vm699, %v698, %v692
  %s704 = scalar_lea.vmem %s4, 4
  %v705 = vld [vmem:[%s704] ss:$8 sm:$0xf]
  %v707 = vlaneseq
  %v708 = vshrl.u32 %v707, 7
  %v709 = vsub.s32 0, %v708
  %v710 = vrot.slane %v705, %v709
  %v711 = vlaneseq
  %v712 = vshrl.u32 %v711, 7
  %v713 = vsub.s32 1, %v712
  %v714 = vrot.slane %v705, %v713
  %v715 = vlaneseq
  %v716 = vshrl.u32 %v715, 7
  %v717 = vsub.s32 2, %v716
  %v718 = vrot.slane %v705, %v717
  %v719 = vlaneseq
  %v720 = vshrl.u32 %v719, 7
  %v721 = vsub.s32 3, %v720
  %v722 = vrot.slane %v705, %v721
  %v727 = vmul.f32 %v702, %v710
  %v728 = vmul.f32 %v701, %v714
  %v729 = vmul.f32 %v700, %v718
  %v730 = vmul.f32 %v703, %v722
  %731 = vst [vmem:[#allocation2 + $0xa0] sm:$0xff] %v727
  %732 = vst [vmem:[#allocation2 + $0xa8] sm:$0xff] %v728
  %733 = vst [vmem:[#allocation2 + $0xb0] sm:$0xff] %v729
  %734 = vst [vmem:[#allocation2 + $0xb8] sm:$0xff] %v730
  %735 = vrot.lane.b32.xlu0 %v506, 113
  %v736 = vpop.permute.xlu0 %735
  %737 = vrot.lane.b32.xlu0 %v507, 113
  %v738 = vpop.permute.xlu0 %737
  %739 = vrot.lane.b32.xlu0 %v508, 113
  %v740 = vpop.permute.xlu0 %739
  %741 = vrot.lane.b32.xlu0 %v509, 113
  %v742 = vpop.permute.xlu0 %741
  %vm743 = vcmp.lt.s32.totalorder %v519, 113
  %v744 = vsel %vm743, %v740, %v742
  %v745 = vsel %vm743, %v738, %v740
  %v746 = vsel %vm743, %v736, %v738
  %v747 = vsel %vm743, %v742, %v736
  %s748 = scalar_lea.vmem %s4, 5
  %v749 = vld [vmem:[%s748] ss:$8 sm:$0xf]
  %v751 = vlaneseq
  %v752 = vshrl.u32 %v751, 7
  %v753 = vsub.s32 0, %v752
  %v754 = vrot.slane %v749, %v753
  %v755 = vlaneseq
  %v756 = vshrl.u32 %v755, 7
  %v757 = vsub.s32 1, %v756
  %v758 = vrot.slane %v749, %v757
  %v759 = vlaneseq
  %v760 = vshrl.u32 %v759, 7
  %v761 = vsub.s32 2, %v760
  %v762 = vrot.slane %v749, %v761
  %v763 = vlaneseq
  %v764 = vshrl.u32 %v763, 7
  %v765 = vsub.s32 3, %v764
  %v766 = vrot.slane %v749, %v765
  %v771 = vmul.f32 %v746, %v754
  %v772 = vmul.f32 %v745, %v758
  %v773 = vmul.f32 %v744, %v762
  %v774 = vmul.f32 %v747, %v766
  %775 = vst [vmem:[#allocation2 + $0xc0] sm:$0xff] %v771
  %776 = vst [vmem:[#allocation2 + $0xc8] sm:$0xff] %v772
  %777 = vst [vmem:[#allocation2 + $0xd0] sm:$0xff] %v773
  %778 = vst [vmem:[#allocation2 + $0xd8] sm:$0xff] %v774
  %779 = vrot.lane.b32.xlu0 %v506, 112
  %v780 = vpop.permute.xlu0 %779
  %781 = vrot.lane.b32.xlu0 %v507, 112
  %v782 = vpop.permute.xlu0 %781
  %783 = vrot.lane.b32.xlu0 %v508, 112
  %v784 = vpop.permute.xlu0 %783
  %785 = vrot.lane.b32.xlu0 %v509, 112
  %v786 = vpop.permute.xlu0 %785
  %vm787 = vcmp.lt.s32.totalorder %v519, 112
  %v788 = vsel %vm787, %v784, %v786
  %v789 = vsel %vm787, %v782, %v784
  %v790 = vsel %vm787, %v780, %v782
  %v791 = vsel %vm787, %v786, %v780
  %s792 = scalar_lea.vmem %s4, 6
  %v793 = vld [vmem:[%s792] ss:$8 sm:$0xf]
  %v795 = vlaneseq
  %v796 = vshrl.u32 %v795, 7
  %v797 = vsub.s32 0, %v796
  %v798 = vrot.slane %v793, %v797
  %v799 = vlaneseq
  %v800 = vshrl.u32 %v799, 7
  %v801 = vsub.s32 1, %v800
  %v802 = vrot.slane %v793, %v801
  %v803 = vlaneseq
  %v804 = vshrl.u32 %v803, 7
  %v805 = vsub.s32 2, %v804
  %v806 = vrot.slane %v793, %v805
  %v807 = vlaneseq
  %v808 = vshrl.u32 %v807, 7
  %v809 = vsub.s32 3, %v808
  %v810 = vrot.slane %v793, %v809
  %v815 = vmul.f32 %v790, %v798
  %v816 = vmul.f32 %v789, %v802
  %v817 = vmul.f32 %v788, %v806
  %v818 = vmul.f32 %v791, %v810
  %819 = vst [vmem:[#allocation2 + $0xe0] sm:$0xff] %v815
  %820 = vst [vmem:[#allocation2 + $0xe8] sm:$0xff] %v816
  %821 = vst [vmem:[#allocation2 + $0xf0] sm:$0xff] %v817
  %822 = vst [vmem:[#allocation2 + $0xf8] sm:$0xff] %v818
  %823 = vrot.lane.b32.xlu0 %v506, 111
  %v824 = vpop.permute.xlu0 %823
  %825 = vrot.lane.b32.xlu0 %v507, 111
  %v826 = vpop.permute.xlu0 %825
  %827 = vrot.lane.b32.xlu0 %v508, 111
  %v828 = vpop.permute.xlu0 %827
  %829 = vrot.lane.b32.xlu0 %v509, 111
  %v830 = vpop.permute.xlu0 %829
  %vm831 = vcmp.lt.s32.totalorder %v519, 111
  %v832 = vsel %vm831, %v828, %v830
  %v833 = vsel %vm831, %v826, %v828
  %v834 = vsel %vm831, %v824, %v826
  %v835 = vsel %vm831, %v830, %v824
  %s836 = scalar_lea.vmem %s4, 7
  %v837 = vld [vmem:[%s836] ss:$8 sm:$0xf]
  %v839 = vlaneseq
  %v840 = vshrl.u32 %v839, 7
  %v841 = vsub.s32 0, %v840
  %v842 = vrot.slane %v837, %v841
  %v843 = vlaneseq
  %v844 = vshrl.u32 %v843, 7
  %v845 = vsub.s32 1, %v844
  %v846 = vrot.slane %v837, %v845
  %v847 = vlaneseq
  %v848 = vshrl.u32 %v847, 7
  %v849 = vsub.s32 2, %v848
  %v850 = vrot.slane %v837, %v849
  %v851 = vlaneseq
  %v852 = vshrl.u32 %v851, 7
  %v853 = vsub.s32 3, %v852
  %v854 = vrot.slane %v837, %v853
  %v859 = vmul.f32 %v834, %v842
  %v860 = vmul.f32 %v833, %v846
  %v861 = vmul.f32 %v832, %v850
  %v862 = vmul.f32 %v835, %v854
  %863 = vst [vmem:[#allocation2 + $0x100] sm:$0xff] %v859
  %864 = vst [vmem:[#allocation2 + $0x108] sm:$0xff] %v860
  %865 = vst [vmem:[#allocation2 + $0x110] sm:$0xff] %v861
  %866 = vst [vmem:[#allocation2 + $0x118] sm:$0xff] %v862
  %v867 = vld [vmem:[%s2] sm:$0xff]
  %v868 = vld [vmem:[#allocation2] sm:$0xff]
  %v869 = vld [vmem:[#allocation2 + $0x8] sm:$0xff]
  %v870 = vld [vmem:[#allocation2 + $0x10] sm:$0xff]
  %v871 = vld [vmem:[#allocation2 + $0x18] sm:$0xff]
  %v872 = vld [vmem:[#allocation2 + $0x20] sm:$0xff]
  %v873 = vld [vmem:[#allocation2 + $0x28] sm:$0xff]
  %v874 = vld [vmem:[#allocation2 + $0x30] sm:$0xff]
  %v875 = vld [vmem:[#allocation2 + $0x38] sm:$0xff]
  %v876 = vld [vmem:[#allocation2 + $0x40] sm:$0xff]
  %v877 = vld [vmem:[#allocation2 + $0x48] sm:$0xff]
  %v878 = vld [vmem:[#allocation2 + $0x50] sm:$0xff]
  %v879 = vld [vmem:[#allocation2 + $0x58] sm:$0xff]
  %v880 = vld [vmem:[#allocation2 + $0x60] sm:$0xff]
  %v881 = vld [vmem:[#allocation2 + $0x68] sm:$0xff]
  %v882 = vld [vmem:[#allocation2 + $0x70] sm:$0xff]
  %v883 = vld [vmem:[#allocation2 + $0x78] sm:$0xff]
  %v884 = vld [vmem:[#allocation2 + $0x80] sm:$0xff]
  %v885 = vld [vmem:[#allocation2 + $0x88] sm:$0xff]
  %v886 = vld [vmem:[#allocation2 + $0x90] sm:$0xff]
  %v887 = vld [vmem:[#allocation2 + $0x98] sm:$0xff]
  %v888 = vld [vmem:[#allocation2 + $0xa0] sm:$0xff]
  %v889 = vld [vmem:[#allocation2 + $0xa8] sm:$0xff]
  %v890 = vld [vmem:[#allocation2 + $0xb0] sm:$0xff]
  %v891 = vld [vmem:[#allocation2 + $0xb8] sm:$0xff]
  %v892 = vld [vmem:[#allocation2 + $0xc0] sm:$0xff]
  %v893 = vld [vmem:[#allocation2 + $0xc8] sm:$0xff]
  %v894 = vld [vmem:[#allocation2 + $0xd0] sm:$0xff]
  %v895 = vld [vmem:[#allocation2 + $0xd8] sm:$0xff]
  %v896 = vld [vmem:[#allocation2 + $0xe0] sm:$0xff]
  %v897 = vld [vmem:[#allocation2 + $0xe8] sm:$0xff]
  %v898 = vld [vmem:[#allocation2 + $0xf0] sm:$0xff]
  %v899 = vld [vmem:[#allocation2 + $0xf8] sm:$0xff]
  %v900 = vld [vmem:[#allocation2 + $0x100] sm:$0xff]
  %v901 = vld [vmem:[#allocation2 + $0x108] sm:$0xff]
  %v902 = vld [vmem:[#allocation2 + $0x110] sm:$0xff]
  %v903 = vld [vmem:[#allocation2 + $0x118] sm:$0xff]
  %vm904 = vcmask 588800
  %v906 = vsel %vm904, %v867, 0
  %908 = vmatprep.subr.mxu0 0.0
  %909 = vmatpush1.msra.mxu0 0.0
  %910 = vmatprep.subr.mxu0 0.0
  %911 = vmatpush1.msra.mxu0 0.0
  %912 = vmatprep.subr.mxu0 0.0
  %913 = vmatpush1.msra.mxu0 0.0
  %914 = vmatprep.subr.mxu0 0.0
  %915 = vmatpush1.msra.mxu0 0.0
  %916 = vmatprep.subr.mxu0 0.0
  %917 = vmatpush1.msra.mxu0 0.0
  %918 = vmatprep.subr.mxu0 0.0
  %919 = vmatpush1.msra.mxu0 0.0
  %920 = vmatprep.subr.mxu0 0.0
  %921 = vmatpush1.msra.mxu0 0.0
  %922 = vmatprep.subr.mxu0 %v901
  %923 = vmatpush1.msra.mxu0 %v900
  %924 = vmatprep.subr.mxu0 %v897
  %925 = vmatpush1.msra.mxu0 %v896
  %926 = vmatprep.subr.mxu0 %v893
  %927 = vmatpush1.msra.mxu0 %v892
  %928 = vmatprep.subr.mxu0 %v889
  %929 = vmatpush1.msra.mxu0 %v888
  %930 = vmatprep.subr.mxu0 %v885
  %931 = vmatpush1.msra.mxu0 %v884
  %932 = vmatprep.subr.mxu0 %v881
  %933 = vmatpush1.msra.mxu0 %v880
  %934 = vmatprep.subr.mxu0 %v877
  %935 = vmatpush1.msra.mxu0 %v876
  %936 = vmatprep.subr.mxu0 %v873
  %937 = vmatpush1.msra.mxu0 %v872
  %938 = vmatprep.subr.mxu0 %v869
  %939 = vmatpush1.msra.mxu0 %v868
  %940 = vmatprep.subr.mxu0 0.0
  %941 = vmatpush2.msra.mxu0 0.0
  %942 = vmatprep.subr.mxu0 0.0
  %943 = vmatpush2.msra.mxu0 0.0
  %944 = vmatprep.subr.mxu0 0.0
  %945 = vmatpush2.msra.mxu0 0.0
  %946 = vmatprep.subr.mxu0 0.0
  %947 = vmatpush2.msra.mxu0 0.0
  %948 = vmatprep.subr.mxu0 0.0
  %949 = vmatpush2.msra.mxu0 0.0
  %950 = vmatprep.subr.mxu0 0.0
  %951 = vmatpush2.msra.mxu0 0.0
  %952 = vmatprep.subr.mxu0 0.0
  %953 = vmatpush2.msra.mxu0 0.0
  %954 = vmatprep.subr.mxu0 0.0
  %955 = vmatpush2.msra.mxu0 0.0
  %956 = vmatprep.subr.mxu0 0.0
  %957 = vmatpush2.msra.mxu0 0.0
  %958 = vmatprep.subr.mxu0 0.0
  %959 = vmatpush2.msra.mxu0 0.0
  %960 = vmatprep.subr.mxu0 0.0
  %961 = vmatpush2.msra.mxu0 0.0
  %962 = vmatprep.subr.mxu0 0.0
  %963 = vmatpush2.msra.mxu0 0.0
  %964 = vmatprep.subr.mxu0 0.0
  %965 = vmatpush2.msra.mxu0 0.0
  %966 = vmatprep.subr.mxu0 0.0
  %967 = vmatpush2.msra.mxu0 0.0
  %968 = vmatprep.subr.mxu0 0.0
  %969 = vmatpush2.msra.mxu0 0.0
  %970 = vmatprep.subr.mxu0 0.0
  %971 = vmatpush2.msra.mxu0 0.0
  %972 = vmatprep.mubr.f32.mxu0 0.0
  %973 = vmatmul.mubr.f32.gmra.mxu0 %v906
  %v974 = vpop.f32.mrf.mxu0
  %v975 = vadd.f32 0.0, %v974
  %v976 = vpop.f32.mrf.mxu0
  %v977 = vadd.f32 0.0, %v976
  %978 = vdwg.mxu0
  %979 = vmatprep.subr.mxu0 0.0
  %980 = vmatpush1.msra.mxu0 0.0
  %981 = vmatprep.subr.mxu0 0.0
  %982 = vmatpush1.msra.mxu0 0.0
  %983 = vmatprep.subr.mxu0 0.0
  %984 = vmatpush1.msra.mxu0 0.0
  %985 = vmatprep.subr.mxu0 0.0
  %986 = vmatpush1.msra.mxu0 0.0
  %987 = vmatprep.subr.mxu0 0.0
  %988 = vmatpush1.msra.mxu0 0.0
  %989 = vmatprep.subr.mxu0 0.0
  %990 = vmatpush1.msra.mxu0 0.0
  %991 = vmatprep.subr.mxu0 0.0
  %992 = vmatpush1.msra.mxu0 0.0
  %993 = vmatprep.subr.mxu0 %v903
  %994 = vmatpush1.msra.mxu0 %v902
  %995 = vmatprep.subr.mxu0 %v899
  %996 = vmatpush1.msra.mxu0 %v898
  %997 = vmatprep.subr.mxu0 %v895
  %998 = vmatpush1.msra.mxu0 %v894
  %999 = vmatprep.subr.mxu0 %v891
  %1000 = vmatpush1.msra.mxu0 %v890
  %1001 = vmatprep.subr.mxu0 %v887
  %1002 = vmatpush1.msra.mxu0 %v886
  %1003 = vmatprep.subr.mxu0 %v883
  %1004 = vmatpush1.msra.mxu0 %v882
  %1005 = vmatprep.subr.mxu0 %v879
  %1006 = vmatpush1.msra.mxu0 %v878
  %1007 = vmatprep.subr.mxu0 %v875
  %1008 = vmatpush1.msra.mxu0 %v874
  %1009 = vmatprep.subr.mxu0 %v871
  %1010 = vmatpush1.msra.mxu0 %v870
  %1011 = vmatprep.subr.mxu0 0.0
  %1012 = vmatpush2.msra.mxu0 0.0
  %1013 = vmatprep.subr.mxu0 0.0
  %1014 = vmatpush2.msra.mxu0 0.0
  %1015 = vmatprep.subr.mxu0 0.0
  %1016 = vmatpush2.msra.mxu0 0.0
  %1017 = vmatprep.subr.mxu0 0.0
  %1018 = vmatpush2.msra.mxu0 0.0
  %1019 = vmatprep.subr.mxu0 0.0
  %1020 = vmatpush2.msra.mxu0 0.0
  %1021 = vmatprep.subr.mxu0 0.0
  %1022 = vmatpush2.msra.mxu0 0.0
  %1023 = vmatprep.subr.mxu0 0.0
  %1024 = vmatpush2.msra.mxu0 0.0
  %1025 = vmatprep.subr.mxu0 0.0
  %1026 = vmatpush2.msra.mxu0 0.0
  %1027 = vmatprep.subr.mxu0 0.0
  %1028 = vmatpush2.msra.mxu0 0.0
  %1029 = vmatprep.subr.mxu0 0.0
  %1030 = vmatpush2.msra.mxu0 0.0
  %1031 = vmatprep.subr.mxu0 0.0
  %1032 = vmatpush2.msra.mxu0 0.0
  %1033 = vmatprep.subr.mxu0 0.0
  %1034 = vmatpush2.msra.mxu0 0.0
  %1035 = vmatprep.subr.mxu0 0.0
  %1036 = vmatpush2.msra.mxu0 0.0
  %1037 = vmatprep.subr.mxu0 0.0
  %1038 = vmatpush2.msra.mxu0 0.0
  %1039 = vmatprep.subr.mxu0 0.0
  %1040 = vmatpush2.msra.mxu0 0.0
  %1041 = vmatprep.subr.mxu0 0.0
  %1042 = vmatpush2.msra.mxu0 0.0
  %1043 = vmatprep.mubr.f32.mxu0 0.0
  %1044 = vmatmul.mubr.f32.gmra.mxu0 %v906
  %v1045 = vpop.f32.mrf.mxu0
  %v1046 = vadd.f32 0.0, %v1045
  %v1047 = vpop.f32.mrf.mxu0
  %v1048 = vadd.f32 0.0, %v1047
  %1049 = vdwg.mxu0
  %v1050 = vld [vmem:[%s7] sm:$0xff]
  %v1051 = vld [vmem:[%s8] sm:$0xff]
  %1052 = vmatprep.subr.mxu0 0.0
  %1053 = vmatpush1.msra.mxu0 1.0
  %1054 = vmatprep.subr.mxu0 0.0
  %1055 = vmatpush1.msra.mxu0 1.0
  %1056 = vmatprep.subr.mxu0 0.0
  %1057 = vmatpush1.msra.mxu0 1.0
  %1058 = vmatprep.subr.mxu0 0.0
  %1059 = vmatpush1.msra.mxu0 1.0
  %1060 = vmatprep.subr.mxu0 0.0
  %1061 = vmatpush1.msra.mxu0 1.0
  %1062 = vmatprep.subr.mxu0 0.0
  %1063 = vmatpush1.msra.mxu0 1.0
  %1064 = vmatprep.subr.mxu0 0.0
  %1065 = vmatpush1.msra.mxu0 1.0
  %1066 = vmatprep.subr.mxu0 0.0
  %1067 = vmatpush1.msra.mxu0 1.0
  %1068 = vmatprep.subr.mxu0 0.0
  %1069 = vmatpush1.msra.mxu0 1.0
  %1070 = vmatprep.subr.mxu0 0.0
  %1071 = vmatpush1.msra.mxu0 1.0
  %1072 = vmatprep.subr.mxu0 0.0
  %1073 = vmatpush1.msra.mxu0 1.0
  %1074 = vmatprep.subr.mxu0 0.0
  %1075 = vmatpush1.msra.mxu0 1.0
  %1076 = vmatprep.subr.mxu0 0.0
  %1077 = vmatpush1.msra.mxu0 1.0
  %1078 = vmatprep.subr.mxu0 0.0
  %1079 = vmatpush1.msra.mxu0 1.0
  %1080 = vmatprep.subr.mxu0 0.0
  %1081 = vmatpush1.msra.mxu0 1.0
  %1082 = vmatprep.subr.mxu0 0.0
  %1083 = vmatpush1.msra.mxu0 1.0
  %1084 = vmatprep.subr.mxu0 0.0
  %1085 = vmatpush2.msra.mxu0 1.0
  %1086 = vmatprep.subr.mxu0 0.0
  %1087 = vmatpush2.msra.mxu0 1.0
  %1088 = vmatprep.subr.mxu0 0.0
  %1089 = vmatpush2.msra.mxu0 1.0
  %1090 = vmatprep.subr.mxu0 0.0
  %1091 = vmatpush2.msra.mxu0 1.0
  %1092 = vmatprep.subr.mxu0 0.0
  %1093 = vmatpush2.msra.mxu0 1.0
  %1094 = vmatprep.subr.mxu0 0.0
  %1095 = vmatpush2.msra.mxu0 1.0
  %1096 = vmatprep.subr.mxu0 0.0
  %1097 = vmatpush2.msra.mxu0 1.0
  %1098 = vmatprep.subr.mxu0 0.0
  %1099 = vmatpush2.msra.mxu0 1.0
  %1100 = vmatprep.subr.mxu0 0.0
  %1101 = vmatpush2.msra.mxu0 1.0
  %1102 = vmatprep.subr.mxu0 0.0
  %1103 = vmatpush2.msra.mxu0 1.0
  %1104 = vmatprep.subr.mxu0 0.0
  %1105 = vmatpush2.msra.mxu0 1.0
  %1106 = vmatprep.subr.mxu0 0.0
  %1107 = vmatpush2.msra.mxu0 1.0
  %1108 = vmatprep.subr.mxu0 0.0
  %1109 = vmatpush2.msra.mxu0 1.0
  %1110 = vmatprep.subr.mxu0 0.0
  %1111 = vmatpush2.msra.mxu0 1.0
  %1112 = vmatprep.subr.mxu0 0.0
  %1113 = vmatpush2.msra.mxu0 1.0
  %1114 = vmatprep.subr.mxu0 0.0
  %1115 = vmatpush2.msra.mxu0 1.0
  %1116 = vmatprep.mubr.f32.mxu0 %v977
  %1117 = vmatmul.mubr.f32.gmra.mxu0 %v975
  %v1118 = vpop.f32.mrf.mxu0
  %v1119 = vadd.f32 0.0, %v1118
  %v1120 = vpop.f32.mrf.mxu0
  %1121 = vdwg.mxu0
  %1122 = vmatprep.subr.mxu0 0.0
  %1123 = vmatpush1.msra.mxu0 1.0
  %1124 = vmatprep.subr.mxu0 0.0
  %1125 = vmatpush1.msra.mxu0 1.0
  %1126 = vmatprep.subr.mxu0 0.0
  %1127 = vmatpush1.msra.mxu0 1.0
  %1128 = vmatprep.subr.mxu0 0.0
  %1129 = vmatpush1.msra.mxu0 1.0
  %1130 = vmatprep.subr.mxu0 0.0
  %1131 = vmatpush1.msra.mxu0 1.0
  %1132 = vmatprep.subr.mxu0 0.0
  %1133 = vmatpush1.msra.mxu0 1.0
  %1134 = vmatprep.subr.mxu0 0.0
  %1135 = vmatpush1.msra.mxu0 1.0
  %1136 = vmatprep.subr.mxu0 0.0
  %1137 = vmatpush1.msra.mxu0 1.0
  %1138 = vmatprep.subr.mxu0 0.0
  %1139 = vmatpush1.msra.mxu0 1.0
  %1140 = vmatprep.subr.mxu0 0.0
  %1141 = vmatpush1.msra.mxu0 1.0
  %1142 = vmatprep.subr.mxu0 0.0
  %1143 = vmatpush1.msra.mxu0 1.0
  %1144 = vmatprep.subr.mxu0 0.0
  %1145 = vmatpush1.msra.mxu0 1.0
  %1146 = vmatprep.subr.mxu0 0.0
  %1147 = vmatpush1.msra.mxu0 1.0
  %1148 = vmatprep.subr.mxu0 0.0
  %1149 = vmatpush1.msra.mxu0 1.0
  %1150 = vmatprep.subr.mxu0 0.0
  %1151 = vmatpush1.msra.mxu0 1.0
  %1152 = vmatprep.subr.mxu0 0.0
  %1153 = vmatpush1.msra.mxu0 1.0
  %1154 = vmatprep.subr.mxu0 0.0
  %1155 = vmatpush2.msra.mxu0 1.0
  %1156 = vmatprep.subr.mxu0 0.0
  %1157 = vmatpush2.msra.mxu0 1.0
  %1158 = vmatprep.subr.mxu0 0.0
  %1159 = vmatpush2.msra.mxu0 1.0
  %1160 = vmatprep.subr.mxu0 0.0
  %1161 = vmatpush2.msra.mxu0 1.0
  %1162 = vmatprep.subr.mxu0 0.0
  %1163 = vmatpush2.msra.mxu0 1.0
  %1164 = vmatprep.subr.mxu0 0.0
  %1165 = vmatpush2.msra.mxu0 1.0
  %1166 = vmatprep.subr.mxu0 0.0
  %1167 = vmatpush2.msra.mxu0 1.0
  %1168 = vmatprep.subr.mxu0 0.0
  %1169 = vmatpush2.msra.mxu0 1.0
  %1170 = vmatprep.subr.mxu0 0.0
  %1171 = vmatpush2.msra.mxu0 1.0
  %1172 = vmatprep.subr.mxu0 0.0
  %1173 = vmatpush2.msra.mxu0 1.0
  %1174 = vmatprep.subr.mxu0 0.0
  %1175 = vmatpush2.msra.mxu0 1.0
  %1176 = vmatprep.subr.mxu0 0.0
  %1177 = vmatpush2.msra.mxu0 1.0
  %1178 = vmatprep.subr.mxu0 0.0
  %1179 = vmatpush2.msra.mxu0 1.0
  %1180 = vmatprep.subr.mxu0 0.0
  %1181 = vmatpush2.msra.mxu0 1.0
  %1182 = vmatprep.subr.mxu0 0.0
  %1183 = vmatpush2.msra.mxu0 1.0
  %1184 = vmatprep.subr.mxu0 0.0
  %1185 = vmatpush2.msra.mxu0 1.0
  %1186 = vmatprep.mubr.f32.mxu0 %v1048
  %1187 = vmatmul.mubr.f32.gmra.mxu0 %v1046
  %v1188 = vpop.f32.mrf.mxu0
  %v1189 = vadd.f32 %v1119, %v1188
  %v1190 = vpop.f32.mrf.mxu0
  %1191 = vdwg.mxu0
  %v1192 = vmul.f32 %v975, %v975
  %v1193 = vmul.f32 %v977, %v977
  %v1194 = vmul.f32 %v1046, %v1046
  %v1195 = vmul.f32 %v1048, %v1048
  %1196 = vmatprep.subr.mxu0 0.0
  %1197 = vmatpush1.msra.mxu0 1.0
  %1198 = vmatprep.subr.mxu0 0.0
  %1199 = vmatpush1.msra.mxu0 1.0
  %1200 = vmatprep.subr.mxu0 0.0
  %1201 = vmatpush1.msra.mxu0 1.0
  %1202 = vmatprep.subr.mxu0 0.0
  %1203 = vmatpush1.msra.mxu0 1.0
  %1204 = vmatprep.subr.mxu0 0.0
  %1205 = vmatpush1.msra.mxu0 1.0
  %1206 = vmatprep.subr.mxu0 0.0
  %1207 = vmatpush1.msra.mxu0 1.0
  %1208 = vmatprep.subr.mxu0 0.0
  %1209 = vmatpush1.msra.mxu0 1.0
  %1210 = vmatprep.subr.mxu0 0.0
  %1211 = vmatpush1.msra.mxu0 1.0
  %1212 = vmatprep.subr.mxu0 0.0
  %1213 = vmatpush1.msra.mxu0 1.0
  %1214 = vmatprep.subr.mxu0 0.0
  %1215 = vmatpush1.msra.mxu0 1.0
  %1216 = vmatprep.subr.mxu0 0.0
  %1217 = vmatpush1.msra.mxu0 1.0
  %1218 = vmatprep.subr.mxu0 0.0
  %1219 = vmatpush1.msra.mxu0 1.0
  %1220 = vmatprep.subr.mxu0 0.0
  %1221 = vmatpush1.msra.mxu0 1.0
  %1222 = vmatprep.subr.mxu0 0.0
  %1223 = vmatpush1.msra.mxu0 1.0
  %1224 = vmatprep.subr.mxu0 0.0
  %1225 = vmatpush1.msra.mxu0 1.0
  %1226 = vmatprep.subr.mxu0 0.0
  %1227 = vmatpush1.msra.mxu0 1.0
  %1228 = vmatprep.subr.mxu0 0.0
  %1229 = vmatpush2.msra.mxu0 1.0
  %1230 = vmatprep.subr.mxu0 0.0
  %1231 = vmatpush2.msra.mxu0 1.0
  %1232 = vmatprep.subr.mxu0 0.0
  %1233 = vmatpush2.msra.mxu0 1.0
  %1234 = vmatprep.subr.mxu0 0.0
  %1235 = vmatpush2.msra.mxu0 1.0
  %1236 = vmatprep.subr.mxu0 0.0
  %1237 = vmatpush2.msra.mxu0 1.0
  %1238 = vmatprep.subr.mxu0 0.0
  %1239 = vmatpush2.msra.mxu0 1.0
  %1240 = vmatprep.subr.mxu0 0.0
  %1241 = vmatpush2.msra.mxu0 1.0
  %1242 = vmatprep.subr.mxu0 0.0
  %1243 = vmatpush2.msra.mxu0 1.0
  %1244 = vmatprep.subr.mxu0 0.0
  %1245 = vmatpush2.msra.mxu0 1.0
  %1246 = vmatprep.subr.mxu0 0.0
  %1247 = vmatpush2.msra.mxu0 1.0
  %1248 = vmatprep.subr.mxu0 0.0
  %1249 = vmatpush2.msra.mxu0 1.0
  %1250 = vmatprep.subr.mxu0 0.0
  %1251 = vmatpush2.msra.mxu0 1.0
  %1252 = vmatprep.subr.mxu0 0.0
  %1253 = vmatpush2.msra.mxu0 1.0
  %1254 = vmatprep.subr.mxu0 0.0
  %1255 = vmatpush2.msra.mxu0 1.0
  %1256 = vmatprep.subr.mxu0 0.0
  %1257 = vmatpush2.msra.mxu0 1.0
  %1258 = vmatprep.subr.mxu0 0.0
  %1259 = vmatpush2.msra.mxu0 1.0
  %1260 = vmatprep.mubr.f32.mxu0 %v1193
  %1261 = vmatmul.mubr.f32.gmra.mxu0 %v1192
  %v1262 = vpop.f32.mrf.mxu0
  %v1263 = vadd.f32 0.0, %v1262
  %v1264 = vpop.f32.mrf.mxu0
  %1265 = vdwg.mxu0
  %1266 = vmatprep.subr.mxu0 0.0
  %1267 = vmatpush1.msra.mxu0 1.0
  %1268 = vmatprep.subr.mxu0 0.0
  %1269 = vmatpush1.msra.mxu0 1.0
  %1270 = vmatprep.subr.mxu0 0.0
  %1271 = vmatpush1.msra.mxu0 1.0
  %1272 = vmatprep.subr.mxu0 0.0
  %1273 = vmatpush1.msra.mxu0 1.0
  %1274 = vmatprep.subr.mxu0 0.0
  %1275 = vmatpush1.msra.mxu0 1.0
  %1276 = vmatprep.subr.mxu0 0.0
  %1277 = vmatpush1.msra.mxu0 1.0
  %1278 = vmatprep.subr.mxu0 0.0
  %1279 = vmatpush1.msra.mxu0 1.0
  %1280 = vmatprep.subr.mxu0 0.0
  %1281 = vmatpush1.msra.mxu0 1.0
  %1282 = vmatprep.subr.mxu0 0.0
  %1283 = vmatpush1.msra.mxu0 1.0
  %1284 = vmatprep.subr.mxu0 0.0
  %1285 = vmatpush1.msra.mxu0 1.0
  %1286 = vmatprep.subr.mxu0 0.0
  %1287 = vmatpush1.msra.mxu0 1.0
  %1288 = vmatprep.subr.mxu0 0.0
  %1289 = vmatpush1.msra.mxu0 1.0
  %1290 = vmatprep.subr.mxu0 0.0
  %1291 = vmatpush1.msra.mxu0 1.0
  %1292 = vmatprep.subr.mxu0 0.0
  %1293 = vmatpush1.msra.mxu0 1.0
  %1294 = vmatprep.subr.mxu0 0.0
  %1295 = vmatpush1.msra.mxu0 1.0
  %1296 = vmatprep.subr.mxu0 0.0
  %1297 = vmatpush1.msra.mxu0 1.0
  %1298 = vmatprep.subr.mxu0 0.0
  %1299 = vmatpush2.msra.mxu0 1.0
  %1300 = vmatprep.subr.mxu0 0.0
  %1301 = vmatpush2.msra.mxu0 1.0
  %1302 = vmatprep.subr.mxu0 0.0
  %1303 = vmatpush2.msra.mxu0 1.0
  %1304 = vmatprep.subr.mxu0 0.0
  %1305 = vmatpush2.msra.mxu0 1.0
  %1306 = vmatprep.subr.mxu0 0.0
  %1307 = vmatpush2.msra.mxu0 1.0
  %1308 = vmatprep.subr.mxu0 0.0
  %1309 = vmatpush2.msra.mxu0 1.0
  %1310 = vmatprep.subr.mxu0 0.0
  %1311 = vmatpush2.msra.mxu0 1.0
  %1312 = vmatprep.subr.mxu0 0.0
  %1313 = vmatpush2.msra.mxu0 1.0
  %1314 = vmatprep.subr.mxu0 0.0
  %1315 = vmatpush2.msra.mxu0 1.0
  %1316 = vmatprep.subr.mxu0 0.0
  %1317 = vmatpush2.msra.mxu0 1.0
  %1318 = vmatprep.subr.mxu0 0.0
  %1319 = vmatpush2.msra.mxu0 1.0
  %1320 = vmatprep.subr.mxu0 0.0
  %1321 = vmatpush2.msra.mxu0 1.0
  %1322 = vmatprep.subr.mxu0 0.0
  %1323 = vmatpush2.msra.mxu0 1.0
  %1324 = vmatprep.subr.mxu0 0.0
  %1325 = vmatpush2.msra.mxu0 1.0
  %1326 = vmatprep.subr.mxu0 0.0
  %1327 = vmatpush2.msra.mxu0 1.0
  %1328 = vmatprep.subr.mxu0 0.0
  %1329 = vmatpush2.msra.mxu0 1.0
  %1330 = vmatprep.mubr.f32.mxu0 %v1195
  %1331 = vmatmul.mubr.f32.gmra.mxu0 %v1194
  %v1332 = vpop.f32.mrf.mxu0
  %v1333 = vadd.f32 %v1263, %v1332
  %v1334 = vpop.f32.mrf.mxu0
  %1335 = vdwg.mxu0
  %v1336 = vmul.f32 %v1189, 0.001953125
  %v1337 = vmul.f32 %v1333, 0.001953125
  %v1338 = vmul.f32 %v1336, %v1336
  %v1339 = vsub.f32 %v1337, %v1338
  %v1340 = vadd.f32 %v1339, 1e-05
  %v1341 = vrsqrt.pop %v1340
  %v1342 = vmul.f32 %v1050, %v1341
  %v1343 = vmul.f32 %v1336, %v1342
  %v1344 = vsub.f32 %v1051, %v1343
  %1346 = vset.pattern.permute.xlu0 0
  %1347 = vperm.xlu0 %1346, %v1342
  %v1348 = vpop.permute.xlu0 %1347
  %v1350 = vmul.f32 %v975, %v1348
  %v1351 = vmul.f32 %v977, %v1348
  %v1352 = vmul.f32 %v1046, %v1348
  %v1353 = vmul.f32 %v1048, %v1348
  %1355 = vset.pattern.permute.xlu0 0
  %1356 = vperm.xlu0 %1355, %v1344
  %v1357 = vpop.permute.xlu0 %1356
  %v1359 = vadd.f32 %v1350, %v1357
  %v1360 = vadd.f32 %v1351, %v1357
  %v1361 = vadd.f32 %v1352, %v1357
  %v1362 = vadd.f32 %v1353, %v1357
  %v1363 = vmax.f32 %v1359, 0.0
  %v1364 = vmax.f32 %v1360, 0.0
  %v1365 = vmax.f32 %v1361, 0.0
  %v1366 = vmax.f32 %v1362, 0.0
  %v1367 = vld [vmem:[%s3] sm:$0xff]
  %v1368 = vld [vmem:[%s3 + $0x8] sm:$0xff]
  %vm1369 = vcmask 64512
  %v1371 = vsel %vm1369, %v1367, 0
  %v1374 = vsel %vm1369, %v1368, 0
  %1376 = vmatprep.subr.mxu0 0.0
  %1377 = vmatpush1.msra.mxu0 0.0
  %1378 = vmatprep.subr.mxu0 0.0
  %1379 = vmatpush1.msra.mxu0 0.0
  %1380 = vmatprep.subr.mxu0 0.0
  %1381 = vmatpush1.msra.mxu0 0.0
  %1382 = vmatprep.subr.mxu0 0.0
  %1383 = vmatpush1.msra.mxu0 0.0
  %1384 = vmatprep.subr.mxu0 0.0
  %1385 = vmatpush1.msra.mxu0 0.0
  %1386 = vmatprep.subr.mxu0 0.0
  %1387 = vmatpush1.msra.mxu0 0.0
  %1388 = vmatprep.subr.mxu0 0.0
  %1389 = vmatpush1.msra.mxu0 0.0
  %1390 = vmatprep.subr.mxu0 0.0
  %1391 = vmatpush1.msra.mxu0 0.0
  %1392 = vmatprep.subr.mxu0 0.0
  %1393 = vmatpush1.msra.mxu0 0.0
  %1394 = vmatprep.subr.mxu0 0.0
  %1395 = vmatpush1.msra.mxu0 0.0
  %1396 = vmatprep.subr.mxu0 0.0
  %1397 = vmatpush1.msra.mxu0 0.0
  %1398 = vmatprep.subr.mxu0 0.0
  %1399 = vmatpush1.msra.mxu0 0.0
  %1400 = vmatprep.subr.mxu0 0.0
  %1401 = vmatpush1.msra.mxu0 0.0
  %1402 = vmatprep.subr.mxu0 0.0
  %1403 = vmatpush1.msra.mxu0 0.0
  %1404 = vmatprep.subr.mxu0 0.0
  %1405 = vmatpush1.msra.mxu0 0.0
  %1406 = vmatprep.subr.mxu0 %v1364
  %1407 = vmatpush1.msra.mxu0 %v1363
  %1408 = vmatprep.subr.mxu0 0.0
  %1409 = vmatpush2.msra.mxu0 0.0
  %1410 = vmatprep.subr.mxu0 0.0
  %1411 = vmatpush2.msra.mxu0 0.0
  %1412 = vmatprep.subr.mxu0 0.0
  %1413 = vmatpush2.msra.mxu0 0.0
  %1414 = vmatprep.subr.mxu0 0.0
  %1415 = vmatpush2.msra.mxu0 0.0
  %1416 = vmatprep.subr.mxu0 0.0
  %1417 = vmatpush2.msra.mxu0 0.0
  %1418 = vmatprep.subr.mxu0 0.0
  %1419 = vmatpush2.msra.mxu0 0.0
  %1420 = vmatprep.subr.mxu0 0.0
  %1421 = vmatpush2.msra.mxu0 0.0
  %1422 = vmatprep.subr.mxu0 0.0
  %1423 = vmatpush2.msra.mxu0 0.0
  %1424 = vmatprep.subr.mxu0 0.0
  %1425 = vmatpush2.msra.mxu0 0.0
  %1426 = vmatprep.subr.mxu0 0.0
  %1427 = vmatpush2.msra.mxu0 0.0
  %1428 = vmatprep.subr.mxu0 0.0
  %1429 = vmatpush2.msra.mxu0 0.0
  %1430 = vmatprep.subr.mxu0 0.0
  %1431 = vmatpush2.msra.mxu0 0.0
  %1432 = vmatprep.subr.mxu0 0.0
  %1433 = vmatpush2.msra.mxu0 0.0
  %1434 = vmatprep.subr.mxu0 0.0
  %1435 = vmatpush2.msra.mxu0 0.0
  %1436 = vmatprep.subr.mxu0 0.0
  %1437 = vmatpush2.msra.mxu0 0.0
  %1438 = vmatprep.subr.mxu0 0.0
  %1439 = vmatpush2.msra.mxu0 0.0
  %1440 = vmatprep.mubr.f32.mxu0 0.0
  %1441 = vmatmul.mubr.f32.gmra.mxu0 %v1371
  %v1442 = vpop.f32.mrf.mxu0
  %v1443 = vadd.f32 0.0, %v1442
  %v1444 = vpop.f32.mrf.mxu0
  %v1445 = vadd.f32 0.0, %v1444
  %1446 = vmatprep.mubr.f32.mxu0 0.0
  %1447 = vmatmul.mubr.f32.gmra.mxu0 %v1374
  %v1448 = vpop.f32.mrf.mxu0
  %v1449 = vadd.f32 0.0, %v1448
  %v1450 = vpop.f32.mrf.mxu0
  %v1451 = vadd.f32 0.0, %v1450
  %1452 = vdwg.mxu0
  %1453 = vmatprep.subr.mxu0 0.0
  %1454 = vmatpush1.msra.mxu0 0.0
  %1455 = vmatprep.subr.mxu0 0.0
  %1456 = vmatpush1.msra.mxu0 0.0
  %1457 = vmatprep.subr.mxu0 0.0
  %1458 = vmatpush1.msra.mxu0 0.0
  %1459 = vmatprep.subr.mxu0 0.0
  %1460 = vmatpush1.msra.mxu0 0.0
  %1461 = vmatprep.subr.mxu0 0.0
  %1462 = vmatpush1.msra.mxu0 0.0
  %1463 = vmatprep.subr.mxu0 0.0
  %1464 = vmatpush1.msra.mxu0 0.0
  %1465 = vmatprep.subr.mxu0 0.0
  %1466 = vmatpush1.msra.mxu0 0.0
  %1467 = vmatprep.subr.mxu0 0.0
  %1468 = vmatpush1.msra.mxu0 0.0
  %1469 = vmatprep.subr.mxu0 0.0
  %1470 = vmatpush1.msra.mxu0 0.0
  %1471 = vmatprep.subr.mxu0 0.0
  %1472 = vmatpush1.msra.mxu0 0.0
  %1473 = vmatprep.subr.mxu0 0.0
  %1474 = vmatpush1.msra.mxu0 0.0
  %1475 = vmatprep.subr.mxu0 0.0
  %1476 = vmatpush1.msra.mxu0 0.0
  %1477 = vmatprep.subr.mxu0 0.0
  %1478 = vmatpush1.msra.mxu0 0.0
  %1479 = vmatprep.subr.mxu0 0.0
  %1480 = vmatpush1.msra.mxu0 0.0
  %1481 = vmatprep.subr.mxu0 0.0
  %1482 = vmatpush1.msra.mxu0 0.0
  %1483 = vmatprep.subr.mxu0 %v1366
  %1484 = vmatpush1.msra.mxu0 %v1365
  %1485 = vmatprep.subr.mxu0 0.0
  %1486 = vmatpush2.msra.mxu0 0.0
  %1487 = vmatprep.subr.mxu0 0.0
  %1488 = vmatpush2.msra.mxu0 0.0
  %1489 = vmatprep.subr.mxu0 0.0
  %1490 = vmatpush2.msra.mxu0 0.0
  %1491 = vmatprep.subr.mxu0 0.0
  %1492 = vmatpush2.msra.mxu0 0.0
  %1493 = vmatprep.subr.mxu0 0.0
  %1494 = vmatpush2.msra.mxu0 0.0
  %1495 = vmatprep.subr.mxu0 0.0
  %1496 = vmatpush2.msra.mxu0 0.0
  %1497 = vmatprep.subr.mxu0 0.0
  %1498 = vmatpush2.msra.mxu0 0.0
  %1499 = vmatprep.subr.mxu0 0.0
  %1500 = vmatpush2.msra.mxu0 0.0
  %1501 = vmatprep.subr.mxu0 0.0
  %1502 = vmatpush2.msra.mxu0 0.0
  %1503 = vmatprep.subr.mxu0 0.0
  %1504 = vmatpush2.msra.mxu0 0.0
  %1505 = vmatprep.subr.mxu0 0.0
  %1506 = vmatpush2.msra.mxu0 0.0
  %1507 = vmatprep.subr.mxu0 0.0
  %1508 = vmatpush2.msra.mxu0 0.0
  %1509 = vmatprep.subr.mxu0 0.0
  %1510 = vmatpush2.msra.mxu0 0.0
  %1511 = vmatprep.subr.mxu0 0.0
  %1512 = vmatpush2.msra.mxu0 0.0
  %1513 = vmatprep.subr.mxu0 0.0
  %1514 = vmatpush2.msra.mxu0 0.0
  %1515 = vmatprep.subr.mxu0 0.0
  %1516 = vmatpush2.msra.mxu0 0.0
  %1517 = vmatprep.mubr.f32.mxu0 0.0
  %1518 = vmatmul.mubr.f32.gmra.mxu0 %v1371
  %v1519 = vpop.f32.mrf.mxu0
  %v1520 = vadd.f32 0.0, %v1519
  %v1521 = vpop.f32.mrf.mxu0
  %v1522 = vadd.f32 0.0, %v1521
  %1523 = vmatprep.mubr.f32.mxu0 0.0
  %1524 = vmatmul.mubr.f32.gmra.mxu0 %v1374
  %v1525 = vpop.f32.mrf.mxu0
  %v1526 = vadd.f32 0.0, %v1525
  %v1527 = vpop.f32.mrf.mxu0
  %v1528 = vadd.f32 0.0, %v1527
  %1529 = vdwg.mxu0
  %v1530 = vld [vmem:[%s9] sm:$0xff]
  %v1531 = vld [vmem:[%s9 + $0x8] sm:$0xff]
  %v1532 = vld [vmem:[%s10] sm:$0xff]
  %v1533 = vld [vmem:[%s10 + $0x8] sm:$0xff]
  %1534 = vmatprep.subr.mxu0 0.0
  %1535 = vmatpush1.msra.mxu0 1.0
  %1536 = vmatprep.subr.mxu0 0.0
  %1537 = vmatpush1.msra.mxu0 1.0
  %1538 = vmatprep.subr.mxu0 0.0
  %1539 = vmatpush1.msra.mxu0 1.0
  %1540 = vmatprep.subr.mxu0 0.0
  %1541 = vmatpush1.msra.mxu0 1.0
  %1542 = vmatprep.subr.mxu0 0.0
  %1543 = vmatpush1.msra.mxu0 1.0
  %1544 = vmatprep.subr.mxu0 0.0
  %1545 = vmatpush1.msra.mxu0 1.0
  %1546 = vmatprep.subr.mxu0 0.0
  %1547 = vmatpush1.msra.mxu0 1.0
  %1548 = vmatprep.subr.mxu0 0.0
  %1549 = vmatpush1.msra.mxu0 1.0
  %1550 = vmatprep.subr.mxu0 0.0
  %1551 = vmatpush1.msra.mxu0 1.0
  %1552 = vmatprep.subr.mxu0 0.0
  %1553 = vmatpush1.msra.mxu0 1.0
  %1554 = vmatprep.subr.mxu0 0.0
  %1555 = vmatpush1.msra.mxu0 1.0
  %1556 = vmatprep.subr.mxu0 0.0
  %1557 = vmatpush1.msra.mxu0 1.0
  %1558 = vmatprep.subr.mxu0 0.0
  %1559 = vmatpush1.msra.mxu0 1.0
  %1560 = vmatprep.subr.mxu0 0.0
  %1561 = vmatpush1.msra.mxu0 1.0
  %1562 = vmatprep.subr.mxu0 0.0
  %1563 = vmatpush1.msra.mxu0 1.0
  %1564 = vmatprep.subr.mxu0 0.0
  %1565 = vmatpush1.msra.mxu0 1.0
  %1566 = vmatprep.subr.mxu0 0.0
  %1567 = vmatpush2.msra.mxu0 1.0
  %1568 = vmatprep.subr.mxu0 0.0
  %1569 = vmatpush2.msra.mxu0 1.0
  %1570 = vmatprep.subr.mxu0 0.0
  %1571 = vmatpush2.msra.mxu0 1.0
  %1572 = vmatprep.subr.mxu0 0.0
  %1573 = vmatpush2.msra.mxu0 1.0
  %1574 = vmatprep.subr.mxu0 0.0
  %1575 = vmatpush2.msra.mxu0 1.0
  %1576 = vmatprep.subr.mxu0 0.0
  %1577 = vmatpush2.msra.mxu0 1.0
  %1578 = vmatprep.subr.mxu0 0.0
  %1579 = vmatpush2.msra.mxu0 1.0
  %1580 = vmatprep.subr.mxu0 0.0
  %1581 = vmatpush2.msra.mxu0 1.0
  %1582 = vmatprep.subr.mxu0 0.0
  %1583 = vmatpush2.msra.mxu0 1.0
  %1584 = vmatprep.subr.mxu0 0.0
  %1585 = vmatpush2.msra.mxu0 1.0
  %1586 = vmatprep.subr.mxu0 0.0
  %1587 = vmatpush2.msra.mxu0 1.0
  %1588 = vmatprep.subr.mxu0 0.0
  %1589 = vmatpush2.msra.mxu0 1.0
  %1590 = vmatprep.subr.mxu0 0.0
  %1591 = vmatpush2.msra.mxu0 1.0
  %1592 = vmatprep.subr.mxu0 0.0
  %1593 = vmatpush2.msra.mxu0 1.0
  %1594 = vmatprep.subr.mxu0 0.0
  %1595 = vmatpush2.msra.mxu0 1.0
  %1596 = vmatprep.subr.mxu0 0.0
  %1597 = vmatpush2.msra.mxu0 1.0
  %1598 = vmatprep.mubr.f32.mxu0 %v1445
  %1599 = vmatmul.mubr.f32.gmra.mxu0 %v1443
  %v1600 = vpop.f32.mrf.mxu0
  %v1601 = vadd.f32 0.0, %v1600
  %v1602 = vpop.f32.mrf.mxu0
  %1603 = vmatprep.mubr.f32.mxu0 %v1451
  %1604 = vmatmul.mubr.f32.gmra.mxu0 %v1449
  %v1605 = vpop.f32.mrf.mxu0
  %v1606 = vadd.f32 0.0, %v1605
  %v1607 = vpop.f32.mrf.mxu0
  %1608 = vdwg.mxu0
  %1609 = vmatprep.subr.mxu0 0.0
  %1610 = vmatpush1.msra.mxu0 1.0
  %1611 = vmatprep.subr.mxu0 0.0
  %1612 = vmatpush1.msra.mxu0 1.0
  %1613 = vmatprep.subr.mxu0 0.0
  %1614 = vmatpush1.msra.mxu0 1.0
  %1615 = vmatprep.subr.mxu0 0.0
  %1616 = vmatpush1.msra.mxu0 1.0
  %1617 = vmatprep.subr.mxu0 0.0
  %1618 = vmatpush1.msra.mxu0 1.0
  %1619 = vmatprep.subr.mxu0 0.0
  %1620 = vmatpush1.msra.mxu0 1.0
  %1621 = vmatprep.subr.mxu0 0.0
  %1622 = vmatpush1.msra.mxu0 1.0
  %1623 = vmatprep.subr.mxu0 0.0
  %1624 = vmatpush1.msra.mxu0 1.0
  %1625 = vmatprep.subr.mxu0 0.0
  %1626 = vmatpush1.msra.mxu0 1.0
  %1627 = vmatprep.subr.mxu0 0.0
  %1628 = vmatpush1.msra.mxu0 1.0
  %1629 = vmatprep.subr.mxu0 0.0
  %1630 = vmatpush1.msra.mxu0 1.0
  %1631 = vmatprep.subr.mxu0 0.0
  %1632 = vmatpush1.msra.mxu0 1.0
  %1633 = vmatprep.subr.mxu0 0.0
  %1634 = vmatpush1.msra.mxu0 1.0
  %1635 = vmatprep.subr.mxu0 0.0
  %1636 = vmatpush1.msra.mxu0 1.0
  %1637 = vmatprep.subr.mxu0 0.0
  %1638 = vmatpush1.msra.mxu0 1.0
  %1639 = vmatprep.subr.mxu0 0.0
  %1640 = vmatpush1.msra.mxu0 1.0
  %1641 = vmatprep.subr.mxu0 0.0
  %1642 = vmatpush2.msra.mxu0 1.0
  %1643 = vmatprep.subr.mxu0 0.0
  %1644 = vmatpush2.msra.mxu0 1.0
  %1645 = vmatprep.subr.mxu0 0.0
  %1646 = vmatpush2.msra.mxu0 1.0
  %1647 = vmatprep.subr.mxu0 0.0
  %1648 = vmatpush2.msra.mxu0 1.0
  %1649 = vmatprep.subr.mxu0 0.0
  %1650 = vmatpush2.msra.mxu0 1.0
  %1651 = vmatprep.subr.mxu0 0.0
  %1652 = vmatpush2.msra.mxu0 1.0
  %1653 = vmatprep.subr.mxu0 0.0
  %1654 = vmatpush2.msra.mxu0 1.0
  %1655 = vmatprep.subr.mxu0 0.0
  %1656 = vmatpush2.msra.mxu0 1.0
  %1657 = vmatprep.subr.mxu0 0.0
  %1658 = vmatpush2.msra.mxu0 1.0
  %1659 = vmatprep.subr.mxu0 0.0
  %1660 = vmatpush2.msra.mxu0 1.0
  %1661 = vmatprep.subr.mxu0 0.0
  %1662 = vmatpush2.msra.mxu0 1.0
  %1663 = vmatprep.subr.mxu0 0.0
  %1664 = vmatpush2.msra.mxu0 1.0
  %1665 = vmatprep.subr.mxu0 0.0
  %1666 = vmatpush2.msra.mxu0 1.0
  %1667 = vmatprep.subr.mxu0 0.0
  %1668 = vmatpush2.msra.mxu0 1.0
  %1669 = vmatprep.subr.mxu0 0.0
  %1670 = vmatpush2.msra.mxu0 1.0
  %1671 = vmatprep.subr.mxu0 0.0
  %1672 = vmatpush2.msra.mxu0 1.0
  %1673 = vmatprep.mubr.f32.mxu0 %v1522
  %1674 = vmatmul.mubr.f32.gmra.mxu0 %v1520
  %v1675 = vpop.f32.mrf.mxu0
  %v1676 = vadd.f32 %v1601, %v1675
  %v1677 = vpop.f32.mrf.mxu0
  %1678 = vmatprep.mubr.f32.mxu0 %v1528
  %1679 = vmatmul.mubr.f32.gmra.mxu0 %v1526
  %v1680 = vpop.f32.mrf.mxu0
  %v1681 = vadd.f32 %v1606, %v1680
  %v1682 = vpop.f32.mrf.mxu0
  %1683 = vdwg.mxu0
  %v1684 = vmul.f32 %v1443, %v1443
  %v1685 = vmul.f32 %v1445, %v1445
  %v1686 = vmul.f32 %v1520, %v1520
  %v1687 = vmul.f32 %v1522, %v1522
  %v1688 = vmul.f32 %v1449, %v1449
  %v1689 = vmul.f32 %v1451, %v1451
  %v1690 = vmul.f32 %v1526, %v1526
  %v1691 = vmul.f32 %v1528, %v1528
  %1692 = vmatprep.subr.mxu0 0.0
  %1693 = vmatpush1.msra.mxu0 1.0
  %1694 = vmatprep.subr.mxu0 0.0
  %1695 = vmatpush1.msra.mxu0 1.0
  %1696 = vmatprep.subr.mxu0 0.0
  %1697 = vmatpush1.msra.mxu0 1.0
  %1698 = vmatprep.subr.mxu0 0.0
  %1699 = vmatpush1.msra.mxu0 1.0
  %1700 = vmatprep.subr.mxu0 0.0
  %1701 = vmatpush1.msra.mxu0 1.0
  %1702 = vmatprep.subr.mxu0 0.0
  %1703 = vmatpush1.msra.mxu0 1.0
  %1704 = vmatprep.subr.mxu0 0.0
  %1705 = vmatpush1.msra.mxu0 1.0
  %1706 = vmatprep.subr.mxu0 0.0
  %1707 = vmatpush1.msra.mxu0 1.0
  %1708 = vmatprep.subr.mxu0 0.0
  %1709 = vmatpush1.msra.mxu0 1.0
  %1710 = vmatprep.subr.mxu0 0.0
  %1711 = vmatpush1.msra.mxu0 1.0
  %1712 = vmatprep.subr.mxu0 0.0
  %1713 = vmatpush1.msra.mxu0 1.0
  %1714 = vmatprep.subr.mxu0 0.0
  %1715 = vmatpush1.msra.mxu0 1.0
  %1716 = vmatprep.subr.mxu0 0.0
  %1717 = vmatpush1.msra.mxu0 1.0
  %1718 = vmatprep.subr.mxu0 0.0
  %1719 = vmatpush1.msra.mxu0 1.0
  %1720 = vmatprep.subr.mxu0 0.0
  %1721 = vmatpush1.msra.mxu0 1.0
  %1722 = vmatprep.subr.mxu0 0.0
  %1723 = vmatpush1.msra.mxu0 1.0
  %1724 = vmatprep.subr.mxu0 0.0
  %1725 = vmatpush2.msra.mxu0 1.0
  %1726 = vmatprep.subr.mxu0 0.0
  %1727 = vmatpush2.msra.mxu0 1.0
  %1728 = vmatprep.subr.mxu0 0.0
  %1729 = vmatpush2.msra.mxu0 1.0
  %1730 = vmatprep.subr.mxu0 0.0
  %1731 = vmatpush2.msra.mxu0 1.0
  %1732 = vmatprep.subr.mxu0 0.0
  %1733 = vmatpush2.msra.mxu0 1.0
  %1734 = vmatprep.subr.mxu0 0.0
  %1735 = vmatpush2.msra.mxu0 1.0
  %1736 = vmatprep.subr.mxu0 0.0
  %1737 = vmatpush2.msra.mxu0 1.0
  %1738 = vmatprep.subr.mxu0 0.0
  %1739 = vmatpush2.msra.mxu0 1.0
  %1740 = vmatprep.subr.mxu0 0.0
  %1741 = vmatpush2.msra.mxu0 1.0
  %1742 = vmatprep.subr.mxu0 0.0
  %1743 = vmatpush2.msra.mxu0 1.0
  %1744 = vmatprep.subr.mxu0 0.0
  %1745 = vmatpush2.msra.mxu0 1.0
  %1746 = vmatprep.subr.mxu0 0.0
  %1747 = vmatpush2.msra.mxu0 1.0
  %1748 = vmatprep.subr.mxu0 0.0
  %1749 = vmatpush2.msra.mxu0 1.0
  %1750 = vmatprep.subr.mxu0 0.0
  %1751 = vmatpush2.msra.mxu0 1.0
  %1752 = vmatprep.subr.mxu0 0.0
  %1753 = vmatpush2.msra.mxu0 1.0
  %1754 = vmatprep.subr.mxu0 0.0
  %1755 = vmatpush2.msra.mxu0 1.0
  %1756 = vmatprep.mubr.f32.mxu0 %v1685
  %1757 = vmatmul.mubr.f32.gmra.mxu0 %v1684
  %v1758 = vpop.f32.mrf.mxu0
  %v1759 = vadd.f32 0.0, %v1758
  %v1760 = vpop.f32.mrf.mxu0
  %1761 = vmatprep.mubr.f32.mxu0 %v1689
  %1762 = vmatmul.mubr.f32.gmra.mxu0 %v1688
  %v1763 = vpop.f32.mrf.mxu0
  %v1764 = vadd.f32 0.0, %v1763
  %v1765 = vpop.f32.mrf.mxu0
  %1766 = vdwg.mxu0
  %1767 = vmatprep.subr.mxu0 0.0
  %1768 = vmatpush1.msra.mxu0 1.0
  %1769 = vmatprep.subr.mxu0 0.0
  %1770 = vmatpush1.msra.mxu0 1.0
  %1771 = vmatprep.subr.mxu0 0.0
  %1772 = vmatpush1.msra.mxu0 1.0
  %1773 = vmatprep.subr.mxu0 0.0
  %1774 = vmatpush1.msra.mxu0 1.0
  %1775 = vmatprep.subr.mxu0 0.0
  %1776 = vmatpush1.msra.mxu0 1.0
  %1777 = vmatprep.subr.mxu0 0.0
  %1778 = vmatpush1.msra.mxu0 1.0
  %1779 = vmatprep.subr.mxu0 0.0
  %1780 = vmatpush1.msra.mxu0 1.0
  %1781 = vmatprep.subr.mxu0 0.0
  %1782 = vmatpush1.msra.mxu0 1.0
  %1783 = vmatprep.subr.mxu0 0.0
  %1784 = vmatpush1.msra.mxu0 1.0
  %1785 = vmatprep.subr.mxu0 0.0
  %1786 = vmatpush1.msra.mxu0 1.0
  %1787 = vmatprep.subr.mxu0 0.0
  %1788 = vmatpush1.msra.mxu0 1.0
  %1789 = vmatprep.subr.mxu0 0.0
  %1790 = vmatpush1.msra.mxu0 1.0
  %1791 = vmatprep.subr.mxu0 0.0
  %1792 = vmatpush1.msra.mxu0 1.0
  %1793 = vmatprep.subr.mxu0 0.0
  %1794 = vmatpush1.msra.mxu0 1.0
  %1795 = vmatprep.subr.mxu0 0.0
  %1796 = vmatpush1.msra.mxu0 1.0
  %1797 = vmatprep.subr.mxu0 0.0
  %1798 = vmatpush1.msra.mxu0 1.0
  %1799 = vmatprep.subr.mxu0 0.0
  %1800 = vmatpush2.msra.mxu0 1.0
  %1801 = vmatprep.subr.mxu0 0.0
  %1802 = vmatpush2.msra.mxu0 1.0
  %1803 = vmatprep.subr.mxu0 0.0
  %1804 = vmatpush2.msra.mxu0 1.0
  %1805 = vmatprep.subr.mxu0 0.0
  %1806 = vmatpush2.msra.mxu0 1.0
  %1807 = vmatprep.subr.mxu0 0.0
  %1808 = vmatpush2.msra.mxu0 1.0
  %1809 = vmatprep.subr.mxu0 0.0
  %1810 = vmatpush2.msra.mxu0 1.0
  %1811 = vmatprep.subr.mxu0 0.0
  %1812 = vmatpush2.msra.mxu0 1.0
  %1813 = vmatprep.subr.mxu0 0.0
  %1814 = vmatpush2.msra.mxu0 1.0
  %1815 = vmatprep.subr.mxu0 0.0
  %1816 = vmatpush2.msra.mxu0 1.0
  %1817 = vmatprep.subr.mxu0 0.0
  %1818 = vmatpush2.msra.mxu0 1.0
  %1819 = vmatprep.subr.mxu0 0.0
  %1820 = vmatpush2.msra.mxu0 1.0
  %1821 = vmatprep.subr.mxu0 0.0
  %1822 = vmatpush2.msra.mxu0 1.0
  %1823 = vmatprep.subr.mxu0 0.0
  %1824 = vmatpush2.msra.mxu0 1.0
  %1825 = vmatprep.subr.mxu0 0.0
  %1826 = vmatpush2.msra.mxu0 1.0
  %1827 = vmatprep.subr.mxu0 0.0
  %1828 = vmatpush2.msra.mxu0 1.0
  %1829 = vmatprep.subr.mxu0 0.0
  %1830 = vmatpush2.msra.mxu0 1.0
  %1831 = vmatprep.mubr.f32.mxu0 %v1687
  %1832 = vmatmul.mubr.f32.gmra.mxu0 %v1686
  %v1833 = vpop.f32.mrf.mxu0
  %v1834 = vadd.f32 %v1759, %v1833
  %v1835 = vpop.f32.mrf.mxu0
  %1836 = vmatprep.mubr.f32.mxu0 %v1691
  %1837 = vmatmul.mubr.f32.gmra.mxu0 %v1690
  %v1838 = vpop.f32.mrf.mxu0
  %v1839 = vadd.f32 %v1764, %v1838
  %v1840 = vpop.f32.mrf.mxu0
  %1841 = vdwg.mxu0
  %v1842 = vmul.f32 %v1676, 0.001953125
  %v1843 = vmul.f32 %v1681, 0.001953125
  %v1844 = vmul.f32 %v1834, 0.001953125
  %v1845 = vmul.f32 %v1839, 0.001953125
  %v1846 = vmul.f32 %v1842, %v1842
  %v1847 = vmul.f32 %v1843, %v1843
  %v1848 = vsub.f32 %v1844, %v1846
  %v1849 = vsub.f32 %v1845, %v1847
  %v1850 = vadd.f32 %v1848, 1e-05
  %v1851 = vadd.f32 %v1849, 1e-05
  %v1852 = vrsqrt.pop %v1850
  %v1853 = vrsqrt.pop %v1851
  %v1854 = vmul.f32 %v1530, %v1852
  %v1855 = vmul.f32 %v1531, %v1853
  %v1856 = vmul.f32 %v1842, %v1854
  %v1857 = vmul.f32 %v1843, %v1855
  %v1858 = vsub.f32 %v1532, %v1856
  %v1859 = vsub.f32 %v1533, %v1857
  %1861 = vset.pattern.permute.xlu0 0
  %1862 = vperm.xlu0 %1861, %v1854
  %v1863 = vpop.permute.xlu0 %1862
  %1866 = vset.pattern.permute.xlu0 0
  %1867 = vperm.xlu0 %1866, %v1855
  %v1868 = vpop.permute.xlu0 %1867
  %v1870 = vmul.f32 %v1443, %v1863
  %v1871 = vmul.f32 %v1445, %v1863
  %v1872 = vmul.f32 %v1520, %v1863
  %v1873 = vmul.f32 %v1522, %v1863
  %v1874 = vmul.f32 %v1449, %v1868
  %v1875 = vmul.f32 %v1451, %v1868
  %v1876 = vmul.f32 %v1526, %v1868
  %v1877 = vmul.f32 %v1528, %v1868
  %1879 = vset.pattern.permute.xlu0 0
  %1880 = vperm.xlu0 %1879, %v1858
  %v1881 = vpop.permute.xlu0 %1880
  %1884 = vset.pattern.permute.xlu0 0
  %1885 = vperm.xlu0 %1884, %v1859
  %v1886 = vpop.permute.xlu0 %1885
  %v1888 = vadd.f32 %v1870, %v1881
  %v1889 = vadd.f32 %v1871, %v1881
  %v1890 = vadd.f32 %v1872, %v1881
  %v1891 = vadd.f32 %v1873, %v1881
  %v1892 = vadd.f32 %v1874, %v1886
  %v1893 = vadd.f32 %v1875, %v1886
  %v1894 = vadd.f32 %v1876, %v1886
  %v1895 = vadd.f32 %v1877, %v1886
  %v1896 = vld [vmem:[%s0] sm:$0xff]
  %v1897 = vld [vmem:[%s0 + $0x8] sm:$0xff]
  %v1898 = vld [vmem:[%s0 + $0x10] sm:$0xff]
  %v1899 = vld [vmem:[%s0 + $0x18] sm:$0xff]
  %v1900 = vld [vmem:[%s0 + $0x20] sm:$0xff]
  %v1901 = vld [vmem:[%s0 + $0x28] sm:$0xff]
  %v1902 = vld [vmem:[%s0 + $0x30] sm:$0xff]
  %v1903 = vld [vmem:[%s0 + $0x38] sm:$0xff]
  %v1904 = vadd.f32 %v1888, %v1896
  %v1905 = vadd.f32 %v1889, %v1897
  %v1906 = vadd.f32 %v1890, %v1898
  %v1907 = vadd.f32 %v1891, %v1899
  %v1908 = vadd.f32 %v1892, %v1900
  %v1909 = vadd.f32 %v1893, %v1901
  %v1910 = vadd.f32 %v1894, %v1902
  %v1911 = vadd.f32 %v1895, %v1903
  %v1912 = vmax.f32 %v1904, 0.0
  %v1913 = vmax.f32 %v1905, 0.0
  %v1914 = vmax.f32 %v1906, 0.0
  %v1915 = vmax.f32 %v1907, 0.0
  %v1916 = vmax.f32 %v1908, 0.0
  %v1917 = vmax.f32 %v1909, 0.0
  %v1918 = vmax.f32 %v1910, 0.0
  %v1919 = vmax.f32 %v1911, 0.0
  %1920 = vst [vmem:[%s11] sm:$0xff] %v1912
  %1921 = vst [vmem:[%s11 + $0x8] sm:$0xff] %v1913
  %1922 = vst [vmem:[%s11 + $0x10] sm:$0xff] %v1914
  %1923 = vst [vmem:[%s11 + $0x18] sm:$0xff] %v1915
  %1924 = vst [vmem:[%s11 + $0x20] sm:$0xff] %v1916
  %1925 = vst [vmem:[%s11 + $0x28] sm:$0xff] %v1917
  %1926 = vst [vmem:[%s11 + $0x30] sm:$0xff] %v1918
  %1927 = vst [vmem:[%s11 + $0x38] sm:$0xff] %v1919
  // Predicated region
  $region46: #{bottleneck_forward.1} parent=0 // pred_check
    _
  $region47: #{bottleneck_forward.1} parent=0 // pred_check_branch
    %1929 = sbr.rel (0) target = $region49
  $region48: #{bottleneck_forward.1} parent=0 // pred_region
    _
  $region49: #{bottleneck_forward.1} parent=0 // pred_fallthru
    _
  // Predicated region
  $region50: #{bottleneck_forward.1} parent=0 // pred_check
    _
  $region51: #{bottleneck_forward.1} parent=0 // pred_check_branch
    %1931 = sbr.rel (0) target = $region53
  $region52: #{bottleneck_forward.1} parent=0 // pred_region
    _
  $region53: #{bottleneck_forward.1} parent=0 // pred_fallthru
    _

</llo_original>
